<compile_context>
chip_gen: v7x
topology: tpu7x:2x2x1
jax: 0.10.0
libtpu: 0.0.40
codegen_flags: <defaults>
</compile_context>

<pallas_src>
import jax
import jax.numpy as jnp
from jax import lax
from jax.experimental import pallas as pl
from jax.experimental.pallas import tpu as pltpu

FEATS = ["stress", "onset", "nucleus", "coda"]


# ----------------------------------------------------------------------------
# Fused Pallas kernel: input projection + masked bi-GRU + attention
#   inputs : x2d (S*NB, I) f32, lens (NB,1) i32, wih_cat (I,6H) f32,
#            gx_bias (1,6H) f32, wblk (2H,6H) f32 block-diag recurrent weights,
#            ghb (1,6H) f32 (n-gate hh bias columns)
#   output : att (B, S, S) f32   (padded batch rows [0:B]=a, [B:2B]=b, rest 0)
# ----------------------------------------------------------------------------
def rhyme_fwd_kernel(x_ref, lens_ref, wih_ref, gxb_ref, wblk_ref, ghb_ref,
                     att_ref):
    B, S, _ = att_ref.shape
    NB = lens_ref.shape[0]
    H = wblk_ref.shape[0] // 2
    H2, H3 = 2 * H, 3 * H

    # --- hoisted input projection: ONE MXU matmul for all timesteps, both
    #     directions, both sequences. r/z biases already include bhh.
    #     Kept as an SSA value (no scratch Ref round-trips).
    gx = (jnp.dot(x_ref[...], wih_ref[...],
                  preferred_element_type=jnp.float32) + gxb_ref[...])

    wblk = wblk_ref[...]                 # (2H, 6H) = blockdiag(whh_f, whh_b)
    ghb = wblk_ref.dtype.type(0) + ghb_ref[...]   # (1, 6H) n-gate hh bias
    lens = lens_ref[...]                 # (NB, 1) int32

    # --- hoisted packed-sequence masks (bool predicates -> vsel in the loop)
    masks = [t < lens for t in range(S)]            # each (NB, 1) bool

    h_f = jnp.zeros((NB, H), jnp.float32)
    h_b = jnp.zeros((NB, H), jnp.float32)
    out_f = [None] * S
    out_b = [None] * S

    # --- fully unrolled bidirectional recurrence: fwd chain at time t and bwd
    #     chain at time S-1-t share ONE fused block-diagonal MXU dot per step.
    for t in range(S):
        tb = S - 1 - t
        gx_t = gx[t * NB:(t + 1) * NB, :]    # (NB, 6H) fwd gates (cols 0:3H)
        gx_r = gx[tb * NB:(tb + 1) * NB, :]  # (NB, 6H) bwd gates (cols 3H:6H)

        h_cat = jnp.concatenate([h_f, h_b], axis=1)               # (NB, 2H)
        gh = jnp.dot(h_cat, wblk, preferred_element_type=jnp.float32) + ghb

        # forward direction (gate order r, z, n)
        r = jax.nn.sigmoid(gx_t[:, 0:H] + gh[:, 0:H])
        z = jax.nn.sigmoid(gx_t[:, H:H2] + gh[:, H:H2])
        n = jnp.tanh(gx_t[:, H2:H3] + r * gh[:, H2:H3])
        h_new = (1.0 - z) * n + z * h_f
        h_f = jnp.where(masks[t], h_new, h_f)
        out_f[t] = jnp.where(masks[t], h_f, 0.0)

        # backward direction at time tb (independent chain, columns 3H:6H)
        r = jax.nn.sigmoid(gx_r[:, H3:H3 + H] + gh[:, H3:H3 + H])
        z = jax.nn.sigmoid(gx_r[:, H3 + H:H3 + H2] + gh[:, H3 + H:H3 + H2])
        n = jnp.tanh(gx_r[:, H3 + H2:] + r * gh[:, H3 + H2:])
        h_new = (1.0 - z) * n + z * h_b
        h_b = jnp.where(masks[tb], h_new, h_b)
        out_b[tb] = jnp.where(masks[tb], h_b, 0.0)

    # --- attention epilogue: ONE MXU dot over the 2H (fwd||bwd) features.
    #     Padded-batch rows 0..B-1 are sequence a, rows B..2B-1 are sequence b.
    full = [jnp.concatenate([out_f[t], out_b[t]], axis=1) for t in range(S)]
    a_rows, b_rows = [], []
    for i in range(B):                       # batch-major row layout
        for t in range(S):
            a_rows.append(full[t][i:i + 1, :])
            b_rows.append(full[t][B + i:B + i + 1, :])
    a_mat = jnp.concatenate(a_rows, axis=0)  # (B*S, 2H)
    b_mat = jnp.concatenate(b_rows, axis=0)  # (B*S, 2H)
    dn = (((1,), (1,)), ((), ()))
    p = lax.dot_general(a_mat, b_mat, dn, preferred_element_type=jnp.float32)
    for i in range(B):                       # extract diagonal (S, S) blocks
        att_ref[i] = p[i * S:(i + 1) * S, i * S:(i + 1) * S]


def fused_forward_pallas(x2d, lens, rp, *, S, B):
    """x2d: (S*NB, I) f32, lens: (NB, 1) int32. Returns att (B, S, S) f32."""
    vm = pl.BlockSpec(memory_space=pltpu.MemorySpace.VMEM)
    return pl.pallas_call(
        rhyme_fwd_kernel,
        out_shape=jax.ShapeDtypeStruct((B, S, S), jnp.float32),
        in_specs=[vm] * 6,
        out_specs=vm,
    )(x2d, lens, rp["wih_cat"], rp["gx_bias"], rp["wblk"], rp["ghb"])


# ----------------------------------------------------------------------------
# Parameter preparation + JAX glue (embedding gather, concat) + full forward
# ----------------------------------------------------------------------------
def prepare_rnn_params(p_fwd, p_bwd):
    """Pack per-direction GRU params into the fused-kernel layout (done once)."""
    H = p_fwd["whh"].shape[0]
    wih_cat = jnp.concatenate([p_fwd["wih"], p_bwd["wih"]],
                              axis=1).astype(jnp.float32)          # (I, 6H)

    def _gx_bias(p):
        # fold bih+bhh for r/z gates; only bih for n (bhh_n goes into ghb)
        return jnp.concatenate(
            [p["bih"][:, :2 * H] + p["bhh"][:, :2 * H], p["bih"][:, 2 * H:]],
            axis=1)

    gx_bias = jnp.concatenate([_gx_bias(p_fwd), _gx_bias(p_bwd)], axis=1)

    # block-diagonal recurrent weight: ONE (2H,6H) matmul drives both chains
    wblk = jnp.zeros((2 * H, 6 * H), jnp.float32)
    wblk = wblk.at[:H, :3 * H].set(p_fwd["whh"])
    wblk = wblk.at[H:, 3 * H:].set(p_bwd["whh"])

    # n-gate hidden-side bias, placed in its columns (zeros elsewhere)
    ghb = jnp.zeros((1, 6 * H), jnp.float32)
    ghb = ghb.at[:, 2 * H:3 * H].set(p_fwd["bhh"][:, 2 * H:])
    ghb = ghb.at[:, 5 * H:].set(p_bwd["bhh"][:, 2 * H:])

    return {"wih_cat": wih_cat, "gx_bias": gx_bias, "wblk": wblk, "ghb": ghb}


def embed_sequences(tokens, emb_tables):
    # nn.Embedding lookups, concatenated over sorted feature names (dim 2);
    # nn.functional.dropout with training=False -> identity.
    return jnp.concatenate(
        [emb_tables[name][tokens[name]] for name in sorted(emb_tables)], axis=2)


def model_forward(a, alen, b, blen, emb_tables, rnn_params):
    emb_a = embed_sequences(a, emb_tables).astype(jnp.float32)   # (S_a, B, I)
    emb_b = embed_sequences(b, emb_tables).astype(jnp.float32)   # (S_b, B, I)
    S_a, B, I = emb_a.shape
    S_b = emb_b.shape[0]
    S = max(S_a, S_b)
    if S_a < S:
        emb_a = jnp.pad(emb_a, ((0, S - S_a), (0, 0), (0, 0)))
    if S_b < S:
        emb_b = jnp.pad(emb_b, ((0, S - S_b), (0, 0), (0, 0)))

    # batch both sequences through ONE GRU call (shared weights) and pad the
    # effective batch to a full 8-row sublane tile.
    NB_real = 2 * B
    NB = ((NB_real + 7) // 8) * 8
    x = jnp.concatenate([emb_a, emb_b], axis=1)                  # (S, 2B, I)
    if NB > NB_real:
        x = jnp.pad(x, ((0, 0), (0, NB - NB_real), (0, 0)))
    x2d = x.reshape(S * NB, I)                                   # (S*NB, I)

    lens = jnp.concatenate([alen.astype(jnp.int32), blen.astype(jnp.int32)])
    if NB > NB_real:
        lens = jnp.pad(lens, (0, NB - NB_real))                  # pad rows -> 0
    lens = lens[:, None]                                         # (NB, 1)

    att = fused_forward_pallas(x2d, lens, rnn_params, S=S, B=B)
    return att[:, :S_a, :S_b]


# ----------------------------------------------------------------------------
# Pure-JAX reference (same math, all f32)
# ----------------------------------------------------------------------------
def _gru_dir_ref(x, mask, p, reverse):
    B = x.shape[1]
    H = p["whh"].shape[0]

    def step(h, inp):
        xt, mt = inp
        gx = jnp.dot(xt, p["wih"]) + p["bih"]
        gh = jnp.dot(h, p["whh"]) + p["bhh"]
        r = jax.nn.sigmoid(gx[:, :H] + gh[:, :H])
        z = jax.nn.sigmoid(gx[:, H:2 * H] + gh[:, H:2 * H])
        n = jnp.tanh(gx[:, 2 * H:] + r * gh[:, 2 * H:])
        h_new = (1.0 - z) * n + z * h
        h_new = mt * h_new + (1.0 - mt) * h
        return h_new, mt * h_new

    xs = (x[::-1], mask[::-1]) if reverse else (x, mask)
    _, outs = lax.scan(step, jnp.zeros((B, H), jnp.float32), xs)
    return outs[::-1] if reverse else outs


def _forward_single_ref(tokens, lengths, emb_tables, p_fwd, p_bwd):
    S = next(iter(tokens.values())).shape[0]
    emb = jnp.concatenate(
        [emb_tables[name][tokens[name]] for name in sorted(emb_tables)], axis=2)
    mask = (jnp.arange(S)[:, None] < lengths[None, :]
            ).astype(jnp.float32)[:, :, None]
    f = _gru_dir_ref(emb.astype(jnp.float32), mask, p_fwd, reverse=False)
    bwd = _gru_dir_ref(emb.astype(jnp.float32), mask, p_bwd, reverse=True)
    return jnp.concatenate([f, bwd], axis=-1)


# ----------------------------------------------------------------------------
if __name__ == "__main__":
    # Small, deterministic configuration
    S, B = 8, 2                 # seq len, batch
    emb_dim, hid_dim = 8, 16    # per-feature embedding dim, GRU hidden dim
    vocab = {"stress": 5, "onset": 12, "nucleus": 13, "coda": 11}
    rnn_inp = emb_dim * len(FEATS)          # 32
    H3 = 3 * hid_dim

    key = jax.random.PRNGKey(0)
    keys = iter(jax.random.split(key, 32))

    # Embedding tables (nn.Embedding weights)
    emb_tables = {name: 0.1 * jax.random.normal(next(keys),
                                                (vocab[name], emb_dim),
                                                dtype=jnp.float32)
                  for name in FEATS}

    def gru_dir_params():
        return {
            "wih": 0.1 * jax.random.normal(next(keys), (rnn_inp, H3), jnp.float32),
            "whh": 0.1 * jax.random.normal(next(keys), (hid_dim, H3), jnp.float32),
            "bih": 0.1 * jax.random.normal(next(keys), (1, H3), jnp.float32),
            "bhh": 0.1 * jax.random.normal(next(keys), (1, H3), jnp.float32),
        }

    p_fwd = gru_dir_params()   # forward direction of the bidirectional GRU
    p_bwd = gru_dir_params()   # backward direction
    rnn_params = prepare_rnn_params(p_fwd, p_bwd)

    # Inputs: dict of (S, B) int token ids per feature, plus lengths.
    def make_tokens():
        return {name: jax.random.randint(next(keys), (S, B), 0, vocab[name],
                                         dtype=jnp.int32)
                for name in FEATS}

    a = make_tokens()
    b = make_tokens()
    alen = jnp.array([S, 5], dtype=jnp.int32)
    blen = jnp.array([6, S], dtype=jnp.int32)

    att = model_forward(a, alen, b, blen, emb_tables, rnn_params)
    att = jax.block_until_ready(att)
    assert att.shape == (B, S, S), att.shape

    # Correctness check against a pure-JAX f32 reference of the same math.
    a_ref = _forward_single_ref(a, alen, emb_tables, p_fwd, p_bwd)
    b_ref = _forward_single_ref(b, blen, emb_tables, p_fwd, p_bwd)
    att_ref = jnp.einsum("sbm,tbm->bst", a_ref, b_ref)
    err = float(jnp.max(jnp.abs(att - att_ref)))
    assert err < 1e-3, f"max abs err {err}"

    print("KERNEL_OK")
</pallas_src>

<mosaic_0001>
module attributes {stable_mosaic.version = 11 : i64} {
  func.func @rhyme_fwd_kernel(%arg0: memref<64x32xf32, #tpu.memory_space<vmem>>, %arg1: memref<8x1xi32, #tpu.memory_space<vmem>>, %arg2: memref<32x96xf32, #tpu.memory_space<vmem>>, %arg3: memref<1x96xf32, #tpu.memory_space<vmem>>, %arg4: memref<32x96xf32, #tpu.memory_space<vmem>>, %arg5: memref<1x96xf32, #tpu.memory_space<vmem>>, %arg6: memref<2x8x8xf32, #tpu.memory_space<vmem>>) attributes {dimension_semantics = [], scalar_prefetch = 0 : i64, scratch_operands = 0 : i64, tpu.core_type = #tpu.core_type<tc>} {
    %c0 = arith.constant 0 : index
    %c0_0 = arith.constant 0 : index
    %0 = vector.load %arg0[%c0, %c0_0] : memref<64x32xf32, #tpu.memory_space<vmem>>, vector<64x32xf32>
    %c0_1 = arith.constant 0 : index
    %c0_2 = arith.constant 0 : index
    %1 = vector.load %arg2[%c0_1, %c0_2] : memref<32x96xf32, #tpu.memory_space<vmem>>, vector<32x96xf32>
    %cst = arith.constant dense<0.000000e+00> : vector<64x96xf32>
    %2 = tpu.matmul %0, %1, %cst {dimension_numbers = #tpu.dot_dimension_numbers<[1], [0], [0], [1], [0, 0, 1, 1], [], []>} : vector<64x32xf32>, vector<32x96xf32>, vector<64x96xf32> -> vector<64x96xf32>
    %c0_3 = arith.constant 0 : index
    %c0_4 = arith.constant 0 : index
    %3 = vector.load %arg3[%c0_3, %c0_4] : memref<1x96xf32, #tpu.memory_space<vmem>>, vector<1x96xf32>
    %4 = vector.broadcast %3 : vector<1x96xf32> to vector<64x96xf32>
    %5 = arith.addf %2, %4 : vector<64x96xf32>
    %c0_5 = arith.constant 0 : index
    %c0_6 = arith.constant 0 : index
    %6 = vector.load %arg4[%c0_5, %c0_6] : memref<32x96xf32, #tpu.memory_space<vmem>>, vector<32x96xf32>
    %c0_7 = arith.constant 0 : index
    %c0_8 = arith.constant 0 : index
    %7 = vector.load %arg5[%c0_7, %c0_8] : memref<1x96xf32, #tpu.memory_space<vmem>>, vector<1x96xf32>
    %cst_9 = arith.constant 0.000000e+00 : f32
    %8 = vector.broadcast %cst_9 : f32 to vector<1x96xf32>
    %9 = arith.addf %8, %7 : vector<1x96xf32>
    %c0_10 = arith.constant 0 : index
    %c0_11 = arith.constant 0 : index
    %10 = vector.load %arg1[%c0_10, %c0_11] : memref<8x1xi32, #tpu.memory_space<vmem>>, vector<8x1xi32>
    %c0_i32 = arith.constant 0 : i32
    %11 = vector.broadcast %c0_i32 : i32 to vector<8x1xi32>
    %12 = arith.cmpi sgt, %10, %11 : vector<8x1xi32>
    %c1_i32 = arith.constant 1 : i32
    %13 = vector.broadcast %c1_i32 : i32 to vector<8x1xi32>
    %14 = arith.cmpi sgt, %10, %13 : vector<8x1xi32>
    %c2_i32 = arith.constant 2 : i32
    %15 = vector.broadcast %c2_i32 : i32 to vector<8x1xi32>
    %16 = arith.cmpi sgt, %10, %15 : vector<8x1xi32>
    %c3_i32 = arith.constant 3 : i32
    %17 = vector.broadcast %c3_i32 : i32 to vector<8x1xi32>
    %18 = arith.cmpi sgt, %10, %17 : vector<8x1xi32>
    %c4_i32 = arith.constant 4 : i32
    %19 = vector.broadcast %c4_i32 : i32 to vector<8x1xi32>
    %20 = arith.cmpi sgt, %10, %19 : vector<8x1xi32>
    %c5_i32 = arith.constant 5 : i32
    %21 = vector.broadcast %c5_i32 : i32 to vector<8x1xi32>
    %22 = arith.cmpi sgt, %10, %21 : vector<8x1xi32>
    %c6_i32 = arith.constant 6 : i32
    %23 = vector.broadcast %c6_i32 : i32 to vector<8x1xi32>
    %24 = arith.cmpi sgt, %10, %23 : vector<8x1xi32>
    %c7_i32 = arith.constant 7 : i32
    %25 = vector.broadcast %c7_i32 : i32 to vector<8x1xi32>
    %26 = arith.cmpi sgt, %10, %25 : vector<8x1xi32>
    %cst_12 = arith.constant 0.000000e+00 : f32
    %27 = vector.broadcast %cst_12 : f32 to vector<8x16xf32>
    %cst_13 = arith.constant 0.000000e+00 : f32
    %28 = vector.broadcast %cst_13 : f32 to vector<8x16xf32>
    %29 = vector.extract_strided_slice %5 {offsets = [0, 0], sizes = [8, 96], strides = [1, 1]} : vector<64x96xf32> to vector<8x96xf32>
    %30 = vector.extract_strided_slice %5 {offsets = [56, 0], sizes = [8, 96], strides = [1, 1]} : vector<64x96xf32> to vector<8x96xf32>
    %31 = tpu.concatenate %27, %28 in 1 : vector<8x16xf32>, vector<8x16xf32> -> vector<8x32xf32>
    %cst_14 = arith.constant dense<0.000000e+00> : vector<8x96xf32>
    %32 = tpu.matmul %31, %6, %cst_14 {dimension_numbers = #tpu.dot_dimension_numbers<[1], [0], [0], [1], [0, 0, 1, 1], [], []>} : vector<8x32xf32>, vector<32x96xf32>, vector<8x96xf32> -> vector<8x96xf32>
    %33 = vector.broadcast %9 : vector<1x96xf32> to vector<8x96xf32>
    %34 = arith.addf %32, %33 : vector<8x96xf32>
    %35 = vector.extract_strided_slice %29 {offsets = [0, 0], sizes = [8, 16], strides = [1, 1]} : vector<8x96xf32> to vector<8x16xf32>
    %36 = vector.extract_strided_slice %34 {offsets = [0, 0], sizes = [8, 16], strides = [1, 1]} : vector<8x96xf32> to vector<8x16xf32>
    %37 = arith.addf %35, %36 : vector<8x16xf32>
    %38 = arith.negf %37 : vector<8x16xf32>
    %39 = math.exp %38 : vector<8x16xf32>
    %cst_15 = arith.constant 1.000000e+00 : f32
    %40 = vector.broadcast %cst_15 : f32 to vector<8x16xf32>
    %41 = arith.addf %40, %39 : vector<8x16xf32>
    %42 = arith.divf %40, %41 : vector<8x16xf32>
    %43 = vector.extract_strided_slice %29 {offsets = [0, 16], sizes = [8, 16], strides = [1, 1]} : vector<8x96xf32> to vector<8x16xf32>
    %44 = vector.extract_strided_slice %34 {offsets = [0, 16], sizes = [8, 16], strides = [1, 1]} : vector<8x96xf32> to vector<8x16xf32>
    %45 = arith.addf %43, %44 : vector<8x16xf32>
    %46 = arith.negf %45 : vector<8x16xf32>
    %47 = math.exp %46 : vector<8x16xf32>
    %cst_16 = arith.constant 1.000000e+00 : f32
    %48 = vector.broadcast %cst_16 : f32 to vector<8x16xf32>
    %49 = arith.addf %48, %47 : vector<8x16xf32>
    %50 = arith.divf %48, %49 : vector<8x16xf32>
    %51 = vector.extract_strided_slice %29 {offsets = [0, 32], sizes = [8, 16], strides = [1, 1]} : vector<8x96xf32> to vector<8x16xf32>
    %52 = vector.extract_strided_slice %34 {offsets = [0, 32], sizes = [8, 16], strides = [1, 1]} : vector<8x96xf32> to vector<8x16xf32>
    %53 = arith.mulf %42, %52 : vector<8x16xf32>
    %54 = arith.addf %51, %53 : vector<8x16xf32>
    %55 = math.tanh %54 : vector<8x16xf32>
    %cst_17 = arith.constant 1.000000e+00 : f32
    %56 = vector.broadcast %cst_17 : f32 to vector<8x16xf32>
    %57 = arith.subf %56, %50 : vector<8x16xf32>
    %58 = arith.mulf %57, %55 : vector<8x16xf32>
    %59 = arith.mulf %50, %27 : vector<8x16xf32>
    %60 = arith.addf %58, %59 : vector<8x16xf32>
    %61 = vector.shape_cast %12 : vector<8x1xi1> to vector<8x1xi1>
    %62 = vector.broadcast %61 : vector<8x1xi1> to vector<8x16xi1>
    %63 = arith.select %62, %60, %27 : vector<8x16xi1>, vector<8x16xf32>
    %cst_18 = arith.constant 0.000000e+00 : f32
    %64 = vector.shape_cast %12 : vector<8x1xi1> to vector<8x1xi1>
    %65 = vector.broadcast %64 : vector<8x1xi1> to vector<8x16xi1>
    %66 = vector.broadcast %cst_18 : f32 to vector<8x16xf32>
    %67 = arith.select %65, %63, %66 : vector<8x16xi1>, vector<8x16xf32>
    %68 = vector.extract_strided_slice %30 {offsets = [0, 48], sizes = [8, 16], strides = [1, 1]} : vector<8x96xf32> to vector<8x16xf32>
    %69 = vector.extract_strided_slice %34 {offsets = [0, 48], sizes = [8, 16], strides = [1, 1]} : vector<8x96xf32> to vector<8x16xf32>
    %70 = arith.addf %68, %69 : vector<8x16xf32>
    %71 = arith.negf %70 : vector<8x16xf32>
    %72 = math.exp %71 : vector<8x16xf32>
    %cst_19 = arith.constant 1.000000e+00 : f32
    %73 = vector.broadcast %cst_19 : f32 to vector<8x16xf32>
    %74 = arith.addf %73, %72 : vector<8x16xf32>
    %75 = arith.divf %73, %74 : vector<8x16xf32>
    %76 = vector.extract_strided_slice %30 {offsets = [0, 64], sizes = [8, 16], strides = [1, 1]} : vector<8x96xf32> to vector<8x16xf32>
    %77 = vector.extract_strided_slice %34 {offsets = [0, 64], sizes = [8, 16], strides = [1, 1]} : vector<8x96xf32> to vector<8x16xf32>
    %78 = arith.addf %76, %77 : vector<8x16xf32>
    %79 = arith.negf %78 : vector<8x16xf32>
    %80 = math.exp %79 : vector<8x16xf32>
    %cst_20 = arith.constant 1.000000e+00 : f32
    %81 = vector.broadcast %cst_20 : f32 to vector<8x16xf32>
    %82 = arith.addf %81, %80 : vector<8x16xf32>
    %83 = arith.divf %81, %82 : vector<8x16xf32>
    %84 = vector.extract_strided_slice %30 {offsets = [0, 80], sizes = [8, 16], strides = [1, 1]} : vector<8x96xf32> to vector<8x16xf32>
    %85 = vector.extract_strided_slice %34 {offsets = [0, 80], sizes = [8, 16], strides = [1, 1]} : vector<8x96xf32> to vector<8x16xf32>
    %86 = arith.mulf %75, %85 : vector<8x16xf32>
    %87 = arith.addf %84, %86 : vector<8x16xf32>
    %88 = math.tanh %87 : vector<8x16xf32>
    %cst_21 = arith.constant 1.000000e+00 : f32
    %89 = vector.broadcast %cst_21 : f32 to vector<8x16xf32>
    %90 = arith.subf %89, %83 : vector<8x16xf32>
    %91 = arith.mulf %90, %88 : vector<8x16xf32>
    %92 = arith.mulf %83, %28 : vector<8x16xf32>
    %93 = arith.addf %91, %92 : vector<8x16xf32>
    %94 = vector.shape_cast %26 : vector<8x1xi1> to vector<8x1xi1>
    %95 = vector.broadcast %94 : vector<8x1xi1> to vector<8x16xi1>
    %96 = arith.select %95, %93, %28 : vector<8x16xi1>, vector<8x16xf32>
    %cst_22 = arith.constant 0.000000e+00 : f32
    %97 = vector.shape_cast %26 : vector<8x1xi1> to vector<8x1xi1>
    %98 = vector.broadcast %97 : vector<8x1xi1> to vector<8x16xi1>
    %99 = vector.broadcast %cst_22 : f32 to vector<8x16xf32>
    %100 = arith.select %98, %96, %99 : vector<8x16xi1>, vector<8x16xf32>
    %101 = vector.extract_strided_slice %5 {offsets = [8, 0], sizes = [8, 96], strides = [1, 1]} : vector<64x96xf32> to vector<8x96xf32>
    %102 = vector.extract_strided_slice %5 {offsets = [48, 0], sizes = [8, 96], strides = [1, 1]} : vector<64x96xf32> to vector<8x96xf32>
    %103 = tpu.concatenate %63, %96 in 1 : vector<8x16xf32>, vector<8x16xf32> -> vector<8x32xf32>
    %cst_23 = arith.constant dense<0.000000e+00> : vector<8x96xf32>
    %104 = tpu.matmul %103, %6, %cst_23 {dimension_numbers = #tpu.dot_dimension_numbers<[1], [0], [0], [1], [0, 0, 1, 1], [], []>} : vector<8x32xf32>, vector<32x96xf32>, vector<8x96xf32> -> vector<8x96xf32>
    %105 = vector.broadcast %9 : vector<1x96xf32> to vector<8x96xf32>
    %106 = arith.addf %104, %105 : vector<8x96xf32>
    %107 = vector.extract_strided_slice %101 {offsets = [0, 0], sizes = [8, 16], strides = [1, 1]} : vector<8x96xf32> to vector<8x16xf32>
    %108 = vector.extract_strided_slice %106 {offsets = [0, 0], sizes = [8, 16], strides = [1, 1]} : vector<8x96xf32> to vector<8x16xf32>
    %109 = arith.addf %107, %108 : vector<8x16xf32>
    %110 = arith.negf %109 : vector<8x16xf32>
    %111 = math.exp %110 : vector<8x16xf32>
    %cst_24 = arith.constant 1.000000e+00 : f32
    %112 = vector.broadcast %cst_24 : f32 to vector<8x16xf32>
    %113 = arith.addf %112, %111 : vector<8x16xf32>
    %114 = arith.divf %112, %113 : vector<8x16xf32>
    %115 = vector.extract_strided_slice %101 {offsets = [0, 16], sizes = [8, 16], strides = [1, 1]} : vector<8x96xf32> to vector<8x16xf32>
    %116 = vector.extract_strided_slice %106 {offsets = [0, 16], sizes = [8, 16], strides = [1, 1]} : vector<8x96xf32> to vector<8x16xf32>
    %117 = arith.addf %115, %116 : vector<8x16xf32>
    %118 = arith.negf %117 : vector<8x16xf32>
    %119 = math.exp %118 : vector<8x16xf32>
    %cst_25 = arith.constant 1.000000e+00 : f32
    %120 = vector.broadcast %cst_25 : f32 to vector<8x16xf32>
    %121 = arith.addf %120, %119 : vector<8x16xf32>
    %122 = arith.divf %120, %121 : vector<8x16xf32>
    %123 = vector.extract_strided_slice %101 {offsets = [0, 32], sizes = [8, 16], strides = [1, 1]} : vector<8x96xf32> to vector<8x16xf32>
    %124 = vector.extract_strided_slice %106 {offsets = [0, 32], sizes = [8, 16], strides = [1, 1]} : vector<8x96xf32> to vector<8x16xf32>
    %125 = arith.mulf %114, %124 : vector<8x16xf32>
    %126 = arith.addf %123, %125 : vector<8x16xf32>
    %127 = math.tanh %126 : vector<8x16xf32>
    %cst_26 = arith.constant 1.000000e+00 : f32
    %128 = vector.broadcast %cst_26 : f32 to vector<8x16xf32>
    %129 = arith.subf %128, %122 : vector<8x16xf32>
    %130 = arith.mulf %129, %127 : vector<8x16xf32>
    %131 = arith.mulf %122, %63 : vector<8x16xf32>
    %132 = arith.addf %130, %131 : vector<8x16xf32>
    %133 = vector.shape_cast %14 : vector<8x1xi1> to vector<8x1xi1>
    %134 = vector.broadcast %133 : vector<8x1xi1> to vector<8x16xi1>
    %135 = arith.select %134, %132, %63 : vector<8x16xi1>, vector<8x16xf32>
    %cst_27 = arith.constant 0.000000e+00 : f32
    %136 = vector.shape_cast %14 : vector<8x1xi1> to vector<8x1xi1>
    %137 = vector.broadcast %136 : vector<8x1xi1> to vector<8x16xi1>
    %138 = vector.broadcast %cst_27 : f32 to vector<8x16xf32>
    %139 = arith.select %137, %135, %138 : vector<8x16xi1>, vector<8x16xf32>
    %140 = vector.extract_strided_slice %102 {offsets = [0, 48], sizes = [8, 16], strides = [1, 1]} : vector<8x96xf32> to vector<8x16xf32>
    %141 = vector.extract_strided_slice %106 {offsets = [0, 48], sizes = [8, 16], strides = [1, 1]} : vector<8x96xf32> to vector<8x16xf32>
    %142 = arith.addf %140, %141 : vector<8x16xf32>
    %143 = arith.negf %142 : vector<8x16xf32>
    %144 = math.exp %143 : vector<8x16xf32>
    %cst_28 = arith.constant 1.000000e+00 : f32
    %145 = vector.broadcast %cst_28 : f32 to vector<8x16xf32>
    %146 = arith.addf %145, %144 : vector<8x16xf32>
    %147 = arith.divf %145, %146 : vector<8x16xf32>
    %148 = vector.extract_strided_slice %102 {offsets = [0, 64], sizes = [8, 16], strides = [1, 1]} : vector<8x96xf32> to vector<8x16xf32>
    %149 = vector.extract_strided_slice %106 {offsets = [0, 64], sizes = [8, 16], strides = [1, 1]} : vector<8x96xf32> to vector<8x16xf32>
    %150 = arith.addf %148, %149 : vector<8x16xf32>
    %151 = arith.negf %150 : vector<8x16xf32>
    %152 = math.exp %151 : vector<8x16xf32>
    %cst_29 = arith.constant 1.000000e+00 : f32
    %153 = vector.broadcast %cst_29 : f32 to vector<8x16xf32>
    %154 = arith.addf %153, %152 : vector<8x16xf32>
    %155 = arith.divf %153, %154 : vector<8x16xf32>
    %156 = vector.extract_strided_slice %102 {offsets = [0, 80], sizes = [8, 16], strides = [1, 1]} : vector<8x96xf32> to vector<8x16xf32>
    %157 = vector.extract_strided_slice %106 {offsets = [0, 80], sizes = [8, 16], strides = [1, 1]} : vector<8x96xf32> to vector<8x16xf32>
    %158 = arith.mulf %147, %157 : vector<8x16xf32>
    %159 = arith.addf %156, %158 : vector<8x16xf32>
    %160 = math.tanh %159 : vector<8x16xf32>
    %cst_30 = arith.constant 1.000000e+00 : f32
    %161 = vector.broadcast %cst_30 : f32 to vector<8x16xf32>
    %162 = arith.subf %161, %155 : vector<8x16xf32>
    %163 = arith.mulf %162, %160 : vector<8x16xf32>
    %164 = arith.mulf %155, %96 : vector<8x16xf32>
    %165 = arith.addf %163, %164 : vector<8x16xf32>
    %166 = vector.shape_cast %24 : vector<8x1xi1> to vector<8x1xi1>
    %167 = vector.broadcast %166 : vector<8x1xi1> to vector<8x16xi1>
    %168 = arith.select %167, %165, %96 : vector<8x16xi1>, vector<8x16xf32>
    %cst_31 = arith.constant 0.000000e+00 : f32
    %169 = vector.shape_cast %24 : vector<8x1xi1> to vector<8x1xi1>
    %170 = vector.broadcast %169 : vector<8x1xi1> to vector<8x16xi1>
    %171 = vector.broadcast %cst_31 : f32 to vector<8x16xf32>
    %172 = arith.select %170, %168, %171 : vector<8x16xi1>, vector<8x16xf32>
    %173 = vector.extract_strided_slice %5 {offsets = [16, 0], sizes = [8, 96], strides = [1, 1]} : vector<64x96xf32> to vector<8x96xf32>
    %174 = vector.extract_strided_slice %5 {offsets = [40, 0], sizes = [8, 96], strides = [1, 1]} : vector<64x96xf32> to vector<8x96xf32>
    %175 = tpu.concatenate %135, %168 in 1 : vector<8x16xf32>, vector<8x16xf32> -> vector<8x32xf32>
    %cst_32 = arith.constant dense<0.000000e+00> : vector<8x96xf32>
    %176 = tpu.matmul %175, %6, %cst_32 {dimension_numbers = #tpu.dot_dimension_numbers<[1], [0], [0], [1], [0, 0, 1, 1], [], []>} : vector<8x32xf32>, vector<32x96xf32>, vector<8x96xf32> -> vector<8x96xf32>
    %177 = vector.broadcast %9 : vector<1x96xf32> to vector<8x96xf32>
    %178 = arith.addf %176, %177 : vector<8x96xf32>
    %179 = vector.extract_strided_slice %173 {offsets = [0, 0], sizes = [8, 16], strides = [1, 1]} : vector<8x96xf32> to vector<8x16xf32>
    %180 = vector.extract_strided_slice %178 {offsets = [0, 0], sizes = [8, 16], strides = [1, 1]} : vector<8x96xf32> to vector<8x16xf32>
    %181 = arith.addf %179, %180 : vector<8x16xf32>
    %182 = arith.negf %181 : vector<8x16xf32>
    %183 = math.exp %182 : vector<8x16xf32>
    %cst_33 = arith.constant 1.000000e+00 : f32
    %184 = vector.broadcast %cst_33 : f32 to vector<8x16xf32>
    %185 = arith.addf %184, %183 : vector<8x16xf32>
    %186 = arith.divf %184, %185 : vector<8x16xf32>
    %187 = vector.extract_strided_slice %173 {offsets = [0, 16], sizes = [8, 16], strides = [1, 1]} : vector<8x96xf32> to vector<8x16xf32>
    %188 = vector.extract_strided_slice %178 {offsets = [0, 16], sizes = [8, 16], strides = [1, 1]} : vector<8x96xf32> to vector<8x16xf32>
    %189 = arith.addf %187, %188 : vector<8x16xf32>
    %190 = arith.negf %189 : vector<8x16xf32>
    %191 = math.exp %190 : vector<8x16xf32>
    %cst_34 = arith.constant 1.000000e+00 : f32
    %192 = vector.broadcast %cst_34 : f32 to vector<8x16xf32>
    %193 = arith.addf %192, %191 : vector<8x16xf32>
    %194 = arith.divf %192, %193 : vector<8x16xf32>
    %195 = vector.extract_strided_slice %173 {offsets = [0, 32], sizes = [8, 16], strides = [1, 1]} : vector<8x96xf32> to vector<8x16xf32>
    %196 = vector.extract_strided_slice %178 {offsets = [0, 32], sizes = [8, 16], strides = [1, 1]} : vector<8x96xf32> to vector<8x16xf32>
    %197 = arith.mulf %186, %196 : vector<8x16xf32>
    %198 = arith.addf %195, %197 : vector<8x16xf32>
    %199 = math.tanh %198 : vector<8x16xf32>
    %cst_35 = arith.constant 1.000000e+00 : f32
    %200 = vector.broadcast %cst_35 : f32 to vector<8x16xf32>
    %201 = arith.subf %200, %194 : vector<8x16xf32>
    %202 = arith.mulf %201, %199 : vector<8x16xf32>
    %203 = arith.mulf %194, %135 : vector<8x16xf32>
    %204 = arith.addf %202, %203 : vector<8x16xf32>
    %205 = vector.shape_cast %16 : vector<8x1xi1> to vector<8x1xi1>
    %206 = vector.broadcast %205 : vector<8x1xi1> to vector<8x16xi1>
    %207 = arith.select %206, %204, %135 : vector<8x16xi1>, vector<8x16xf32>
    %cst_36 = arith.constant 0.000000e+00 : f32
    %208 = vector.shape_cast %16 : vector<8x1xi1> to vector<8x1xi1>
    %209 = vector.broadcast %208 : vector<8x1xi1> to vector<8x16xi1>
    %210 = vector.broadcast %cst_36 : f32 to vector<8x16xf32>
    %211 = arith.select %209, %207, %210 : vector<8x16xi1>, vector<8x16xf32>
    %212 = vector.extract_strided_slice %174 {offsets = [0, 48], sizes = [8, 16], strides = [1, 1]} : vector<8x96xf32> to vector<8x16xf32>
    %213 = vector.extract_strided_slice %178 {offsets = [0, 48], sizes = [8, 16], strides = [1, 1]} : vector<8x96xf32> to vector<8x16xf32>
    %214 = arith.addf %212, %213 : vector<8x16xf32>
    %215 = arith.negf %214 : vector<8x16xf32>
    %216 = math.exp %215 : vector<8x16xf32>
    %cst_37 = arith.constant 1.000000e+00 : f32
    %217 = vector.broadcast %cst_37 : f32 to vector<8x16xf32>
    %218 = arith.addf %217, %216 : vector<8x16xf32>
    %219 = arith.divf %217, %218 : vector<8x16xf32>
    %220 = vector.extract_strided_slice %174 {offsets = [0, 64], sizes = [8, 16], strides = [1, 1]} : vector<8x96xf32> to vector<8x16xf32>
    %221 = vector.extract_strided_slice %178 {offsets = [0, 64], sizes = [8, 16], strides = [1, 1]} : vector<8x96xf32> to vector<8x16xf32>
    %222 = arith.addf %220, %221 : vector<8x16xf32>
    %223 = arith.negf %222 : vector<8x16xf32>
    %224 = math.exp %223 : vector<8x16xf32>
    %cst_38 = arith.constant 1.000000e+00 : f32
    %225 = vector.broadcast %cst_38 : f32 to vector<8x16xf32>
    %226 = arith.addf %225, %224 : vector<8x16xf32>
    %227 = arith.divf %225, %226 : vector<8x16xf32>
    %228 = vector.extract_strided_slice %174 {offsets = [0, 80], sizes = [8, 16], strides = [1, 1]} : vector<8x96xf32> to vector<8x16xf32>
    %229 = vector.extract_strided_slice %178 {offsets = [0, 80], sizes = [8, 16], strides = [1, 1]} : vector<8x96xf32> to vector<8x16xf32>
    %230 = arith.mulf %219, %229 : vector<8x16xf32>
    %231 = arith.addf %228, %230 : vector<8x16xf32>
    %232 = math.tanh %231 : vector<8x16xf32>
    %cst_39 = arith.constant 1.000000e+00 : f32
    %233 = vector.broadcast %cst_39 : f32 to vector<8x16xf32>
    %234 = arith.subf %233, %227 : vector<8x16xf32>
    %235 = arith.mulf %234, %232 : vector<8x16xf32>
    %236 = arith.mulf %227, %168 : vector<8x16xf32>
    %237 = arith.addf %235, %236 : vector<8x16xf32>
    %238 = vector.shape_cast %22 : vector<8x1xi1> to vector<8x1xi1>
    %239 = vector.broadcast %238 : vector<8x1xi1> to vector<8x16xi1>
    %240 = arith.select %239, %237, %168 : vector<8x16xi1>, vector<8x16xf32>
    %cst_40 = arith.constant 0.000000e+00 : f32
    %241 = vector.shape_cast %22 : vector<8x1xi1> to vector<8x1xi1>
    %242 = vector.broadcast %241 : vector<8x1xi1> to vector<8x16xi1>
    %243 = vector.broadcast %cst_40 : f32 to vector<8x16xf32>
    %244 = arith.select %242, %240, %243 : vector<8x16xi1>, vector<8x16xf32>
    %245 = vector.extract_strided_slice %5 {offsets = [24, 0], sizes = [8, 96], strides = [1, 1]} : vector<64x96xf32> to vector<8x96xf32>
    %246 = vector.extract_strided_slice %5 {offsets = [32, 0], sizes = [8, 96], strides = [1, 1]} : vector<64x96xf32> to vector<8x96xf32>
    %247 = tpu.concatenate %207, %240 in 1 : vector<8x16xf32>, vector<8x16xf32> -> vector<8x32xf32>
    %cst_41 = arith.constant dense<0.000000e+00> : vector<8x96xf32>
    %248 = tpu.matmul %247, %6, %cst_41 {dimension_numbers = #tpu.dot_dimension_numbers<[1], [0], [0], [1], [0, 0, 1, 1], [], []>} : vector<8x32xf32>, vector<32x96xf32>, vector<8x96xf32> -> vector<8x96xf32>
    %249 = vector.broadcast %9 : vector<1x96xf32> to vector<8x96xf32>
    %250 = arith.addf %248, %249 : vector<8x96xf32>
    %251 = vector.extract_strided_slice %245 {offsets = [0, 0], sizes = [8, 16], strides = [1, 1]} : vector<8x96xf32> to vector<8x16xf32>
    %252 = vector.extract_strided_slice %250 {offsets = [0, 0], sizes = [8, 16], strides = [1, 1]} : vector<8x96xf32> to vector<8x16xf32>
    %253 = arith.addf %251, %252 : vector<8x16xf32>
    %254 = arith.negf %253 : vector<8x16xf32>
    %255 = math.exp %254 : vector<8x16xf32>
    %cst_42 = arith.constant 1.000000e+00 : f32
    %256 = vector.broadcast %cst_42 : f32 to vector<8x16xf32>
    %257 = arith.addf %256, %255 : vector<8x16xf32>
    %258 = arith.divf %256, %257 : vector<8x16xf32>
    %259 = vector.extract_strided_slice %245 {offsets = [0, 16], sizes = [8, 16], strides = [1, 1]} : vector<8x96xf32> to vector<8x16xf32>
    %260 = vector.extract_strided_slice %250 {offsets = [0, 16], sizes = [8, 16], strides = [1, 1]} : vector<8x96xf32> to vector<8x16xf32>
    %261 = arith.addf %259, %260 : vector<8x16xf32>
    %262 = arith.negf %261 : vector<8x16xf32>
    %263 = math.exp %262 : vector<8x16xf32>
    %cst_43 = arith.constant 1.000000e+00 : f32
    %264 = vector.broadcast %cst_43 : f32 to vector<8x16xf32>
    %265 = arith.addf %264, %263 : vector<8x16xf32>
    %266 = arith.divf %264, %265 : vector<8x16xf32>
    %267 = vector.extract_strided_slice %245 {offsets = [0, 32], sizes = [8, 16], strides = [1, 1]} : vector<8x96xf32> to vector<8x16xf32>
    %268 = vector.extract_strided_slice %250 {offsets = [0, 32], sizes = [8, 16], strides = [1, 1]} : vector<8x96xf32> to vector<8x16xf32>
    %269 = arith.mulf %258, %268 : vector<8x16xf32>
    %270 = arith.addf %267, %269 : vector<8x16xf32>
    %271 = math.tanh %270 : vector<8x16xf32>
    %cst_44 = arith.constant 1.000000e+00 : f32
    %272 = vector.broadcast %cst_44 : f32 to vector<8x16xf32>
    %273 = arith.subf %272, %266 : vector<8x16xf32>
    %274 = arith.mulf %273, %271 : vector<8x16xf32>
    %275 = arith.mulf %266, %207 : vector<8x16xf32>
    %276 = arith.addf %274, %275 : vector<8x16xf32>
    %277 = vector.shape_cast %18 : vector<8x1xi1> to vector<8x1xi1>
    %278 = vector.broadcast %277 : vector<8x1xi1> to vector<8x16xi1>
    %279 = arith.select %278, %276, %207 : vector<8x16xi1>, vector<8x16xf32>
    %cst_45 = arith.constant 0.000000e+00 : f32
    %280 = vector.shape_cast %18 : vector<8x1xi1> to vector<8x1xi1>
    %281 = vector.broadcast %280 : vector<8x1xi1> to vector<8x16xi1>
    %282 = vector.broadcast %cst_45 : f32 to vector<8x16xf32>
    %283 = arith.select %281, %279, %282 : vector<8x16xi1>, vector<8x16xf32>
    %284 = vector.extract_strided_slice %246 {offsets = [0, 48], sizes = [8, 16], strides = [1, 1]} : vector<8x96xf32> to vector<8x16xf32>
    %285 = vector.extract_strided_slice %250 {offsets = [0, 48], sizes = [8, 16], strides = [1, 1]} : vector<8x96xf32> to vector<8x16xf32>
    %286 = arith.addf %284, %285 : vector<8x16xf32>
    %287 = arith.negf %286 : vector<8x16xf32>
    %288 = math.exp %287 : vector<8x16xf32>
    %cst_46 = arith.constant 1.000000e+00 : f32
    %289 = vector.broadcast %cst_46 : f32 to vector<8x16xf32>
    %290 = arith.addf %289, %288 : vector<8x16xf32>
    %291 = arith.divf %289, %290 : vector<8x16xf32>
    %292 = vector.extract_strided_slice %246 {offsets = [0, 64], sizes = [8, 16], strides = [1, 1]} : vector<8x96xf32> to vector<8x16xf32>
    %293 = vector.extract_strided_slice %250 {offsets = [0, 64], sizes = [8, 16], strides = [1, 1]} : vector<8x96xf32> to vector<8x16xf32>
    %294 = arith.addf %292, %293 : vector<8x16xf32>
    %295 = arith.negf %294 : vector<8x16xf32>
    %296 = math.exp %295 : vector<8x16xf32>
    %cst_47 = arith.constant 1.000000e+00 : f32
    %297 = vector.broadcast %cst_47 : f32 to vector<8x16xf32>
    %298 = arith.addf %297, %296 : vector<8x16xf32>
    %299 = arith.divf %297, %298 : vector<8x16xf32>
    %300 = vector.extract_strided_slice %246 {offsets = [0, 80], sizes = [8, 16], strides = [1, 1]} : vector<8x96xf32> to vector<8x16xf32>
    %301 = vector.extract_strided_slice %250 {offsets = [0, 80], sizes = [8, 16], strides = [1, 1]} : vector<8x96xf32> to vector<8x16xf32>
    %302 = arith.mulf %291, %301 : vector<8x16xf32>
    %303 = arith.addf %300, %302 : vector<8x16xf32>
    %304 = math.tanh %303 : vector<8x16xf32>
    %cst_48 = arith.constant 1.000000e+00 : f32
    %305 = vector.broadcast %cst_48 : f32 to vector<8x16xf32>
    %306 = arith.subf %305, %299 : vector<8x16xf32>
    %307 = arith.mulf %306, %304 : vector<8x16xf32>
    %308 = arith.mulf %299, %240 : vector<8x16xf32>
    %309 = arith.addf %307, %308 : vector<8x16xf32>
    %310 = vector.shape_cast %20 : vector<8x1xi1> to vector<8x1xi1>
    %311 = vector.broadcast %310 : vector<8x1xi1> to vector<8x16xi1>
    %312 = arith.select %311, %309, %240 : vector<8x16xi1>, vector<8x16xf32>
    %cst_49 = arith.constant 0.000000e+00 : f32
    %313 = vector.shape_cast %20 : vector<8x1xi1> to vector<8x1xi1>
    %314 = vector.broadcast %313 : vector<8x1xi1> to vector<8x16xi1>
    %315 = vector.broadcast %cst_49 : f32 to vector<8x16xf32>
    %316 = arith.select %314, %312, %315 : vector<8x16xi1>, vector<8x16xf32>
    %317 = vector.extract_strided_slice %5 {offsets = [32, 0], sizes = [8, 96], strides = [1, 1]} : vector<64x96xf32> to vector<8x96xf32>
    %318 = vector.extract_strided_slice %5 {offsets = [24, 0], sizes = [8, 96], strides = [1, 1]} : vector<64x96xf32> to vector<8x96xf32>
    %319 = tpu.concatenate %279, %312 in 1 : vector<8x16xf32>, vector<8x16xf32> -> vector<8x32xf32>
    %cst_50 = arith.constant dense<0.000000e+00> : vector<8x96xf32>
    %320 = tpu.matmul %319, %6, %cst_50 {dimension_numbers = #tpu.dot_dimension_numbers<[1], [0], [0], [1], [0, 0, 1, 1], [], []>} : vector<8x32xf32>, vector<32x96xf32>, vector<8x96xf32> -> vector<8x96xf32>
    %321 = vector.broadcast %9 : vector<1x96xf32> to vector<8x96xf32>
    %322 = arith.addf %320, %321 : vector<8x96xf32>
    %323 = vector.extract_strided_slice %317 {offsets = [0, 0], sizes = [8, 16], strides = [1, 1]} : vector<8x96xf32> to vector<8x16xf32>
    %324 = vector.extract_strided_slice %322 {offsets = [0, 0], sizes = [8, 16], strides = [1, 1]} : vector<8x96xf32> to vector<8x16xf32>
    %325 = arith.addf %323, %324 : vector<8x16xf32>
    %326 = arith.negf %325 : vector<8x16xf32>
    %327 = math.exp %326 : vector<8x16xf32>
    %cst_51 = arith.constant 1.000000e+00 : f32
    %328 = vector.broadcast %cst_51 : f32 to vector<8x16xf32>
    %329 = arith.addf %328, %327 : vector<8x16xf32>
    %330 = arith.divf %328, %329 : vector<8x16xf32>
    %331 = vector.extract_strided_slice %317 {offsets = [0, 16], sizes = [8, 16], strides = [1, 1]} : vector<8x96xf32> to vector<8x16xf32>
    %332 = vector.extract_strided_slice %322 {offsets = [0, 16], sizes = [8, 16], strides = [1, 1]} : vector<8x96xf32> to vector<8x16xf32>
    %333 = arith.addf %331, %332 : vector<8x16xf32>
    %334 = arith.negf %333 : vector<8x16xf32>
    %335 = math.exp %334 : vector<8x16xf32>
    %cst_52 = arith.constant 1.000000e+00 : f32
    %336 = vector.broadcast %cst_52 : f32 to vector<8x16xf32>
    %337 = arith.addf %336, %335 : vector<8x16xf32>
    %338 = arith.divf %336, %337 : vector<8x16xf32>
    %339 = vector.extract_strided_slice %317 {offsets = [0, 32], sizes = [8, 16], strides = [1, 1]} : vector<8x96xf32> to vector<8x16xf32>
    %340 = vector.extract_strided_slice %322 {offsets = [0, 32], sizes = [8, 16], strides = [1, 1]} : vector<8x96xf32> to vector<8x16xf32>
    %341 = arith.mulf %330, %340 : vector<8x16xf32>
    %342 = arith.addf %339, %341 : vector<8x16xf32>
    %343 = math.tanh %342 : vector<8x16xf32>
    %cst_53 = arith.constant 1.000000e+00 : f32
    %344 = vector.broadcast %cst_53 : f32 to vector<8x16xf32>
    %345 = arith.subf %344, %338 : vector<8x16xf32>
    %346 = arith.mulf %345, %343 : vector<8x16xf32>
    %347 = arith.mulf %338, %279 : vector<8x16xf32>
    %348 = arith.addf %346, %347 : vector<8x16xf32>
    %349 = vector.shape_cast %20 : vector<8x1xi1> to vector<8x1xi1>
    %350 = vector.broadcast %349 : vector<8x1xi1> to vector<8x16xi1>
    %351 = arith.select %350, %348, %279 : vector<8x16xi1>, vector<8x16xf32>
    %cst_54 = arith.constant 0.000000e+00 : f32
    %352 = vector.shape_cast %20 : vector<8x1xi1> to vector<8x1xi1>
    %353 = vector.broadcast %352 : vector<8x1xi1> to vector<8x16xi1>
    %354 = vector.broadcast %cst_54 : f32 to vector<8x16xf32>
    %355 = arith.select %353, %351, %354 : vector<8x16xi1>, vector<8x16xf32>
    %356 = vector.extract_strided_slice %318 {offsets = [0, 48], sizes = [8, 16], strides = [1, 1]} : vector<8x96xf32> to vector<8x16xf32>
    %357 = vector.extract_strided_slice %322 {offsets = [0, 48], sizes = [8, 16], strides = [1, 1]} : vector<8x96xf32> to vector<8x16xf32>
    %358 = arith.addf %356, %357 : vector<8x16xf32>
    %359 = arith.negf %358 : vector<8x16xf32>
    %360 = math.exp %359 : vector<8x16xf32>
    %cst_55 = arith.constant 1.000000e+00 : f32
    %361 = vector.broadcast %cst_55 : f32 to vector<8x16xf32>
    %362 = arith.addf %361, %360 : vector<8x16xf32>
    %363 = arith.divf %361, %362 : vector<8x16xf32>
    %364 = vector.extract_strided_slice %318 {offsets = [0, 64], sizes = [8, 16], strides = [1, 1]} : vector<8x96xf32> to vector<8x16xf32>
    %365 = vector.extract_strided_slice %322 {offsets = [0, 64], sizes = [8, 16], strides = [1, 1]} : vector<8x96xf32> to vector<8x16xf32>
    %366 = arith.addf %364, %365 : vector<8x16xf32>
    %367 = arith.negf %366 : vector<8x16xf32>
    %368 = math.exp %367 : vector<8x16xf32>
    %cst_56 = arith.constant 1.000000e+00 : f32
    %369 = vector.broadcast %cst_56 : f32 to vector<8x16xf32>
    %370 = arith.addf %369, %368 : vector<8x16xf32>
    %371 = arith.divf %369, %370 : vector<8x16xf32>
    %372 = vector.extract_strided_slice %318 {offsets = [0, 80], sizes = [8, 16], strides = [1, 1]} : vector<8x96xf32> to vector<8x16xf32>
    %373 = vector.extract_strided_slice %322 {offsets = [0, 80], sizes = [8, 16], strides = [1, 1]} : vector<8x96xf32> to vector<8x16xf32>
    %374 = arith.mulf %363, %373 : vector<8x16xf32>
    %375 = arith.addf %372, %374 : vector<8x16xf32>
    %376 = math.tanh %375 : vector<8x16xf32>
    %cst_57 = arith.constant 1.000000e+00 : f32
    %377 = vector.broadcast %cst_57 : f32 to vector<8x16xf32>
    %378 = arith.subf %377, %371 : vector<8x16xf32>
    %379 = arith.mulf %378, %376 : vector<8x16xf32>
    %380 = arith.mulf %371, %312 : vector<8x16xf32>
    %381 = arith.addf %379, %380 : vector<8x16xf32>
    %382 = vector.shape_cast %18 : vector<8x1xi1> to vector<8x1xi1>
    %383 = vector.broadcast %382 : vector<8x1xi1> to vector<8x16xi1>
    %384 = arith.select %383, %381, %312 : vector<8x16xi1>, vector<8x16xf32>
    %cst_58 = arith.constant 0.000000e+00 : f32
    %385 = vector.shape_cast %18 : vector<8x1xi1> to vector<8x1xi1>
    %386 = vector.broadcast %385 : vector<8x1xi1> to vector<8x16xi1>
    %387 = vector.broadcast %cst_58 : f32 to vector<8x16xf32>
    %388 = arith.select %386, %384, %387 : vector<8x16xi1>, vector<8x16xf32>
    %389 = vector.extract_strided_slice %5 {offsets = [40, 0], sizes = [8, 96], strides = [1, 1]} : vector<64x96xf32> to vector<8x96xf32>
    %390 = vector.extract_strided_slice %5 {offsets = [16, 0], sizes = [8, 96], strides = [1, 1]} : vector<64x96xf32> to vector<8x96xf32>
    %391 = tpu.concatenate %351, %384 in 1 : vector<8x16xf32>, vector<8x16xf32> -> vector<8x32xf32>
    %cst_59 = arith.constant dense<0.000000e+00> : vector<8x96xf32>
    %392 = tpu.matmul %391, %6, %cst_59 {dimension_numbers = #tpu.dot_dimension_numbers<[1], [0], [0], [1], [0, 0, 1, 1], [], []>} : vector<8x32xf32>, vector<32x96xf32>, vector<8x96xf32> -> vector<8x96xf32>
    %393 = vector.broadcast %9 : vector<1x96xf32> to vector<8x96xf32>
    %394 = arith.addf %392, %393 : vector<8x96xf32>
    %395 = vector.extract_strided_slice %389 {offsets = [0, 0], sizes = [8, 16], strides = [1, 1]} : vector<8x96xf32> to vector<8x16xf32>
    %396 = vector.extract_strided_slice %394 {offsets = [0, 0], sizes = [8, 16], strides = [1, 1]} : vector<8x96xf32> to vector<8x16xf32>
    %397 = arith.addf %395, %396 : vector<8x16xf32>
    %398 = arith.negf %397 : vector<8x16xf32>
    %399 = math.exp %398 : vector<8x16xf32>
    %cst_60 = arith.constant 1.000000e+00 : f32
    %400 = vector.broadcast %cst_60 : f32 to vector<8x16xf32>
    %401 = arith.addf %400, %399 : vector<8x16xf32>
    %402 = arith.divf %400, %401 : vector<8x16xf32>
    %403 = vector.extract_strided_slice %389 {offsets = [0, 16], sizes = [8, 16], strides = [1, 1]} : vector<8x96xf32> to vector<8x16xf32>
    %404 = vector.extract_strided_slice %394 {offsets = [0, 16], sizes = [8, 16], strides = [1, 1]} : vector<8x96xf32> to vector<8x16xf32>
    %405 = arith.addf %403, %404 : vector<8x16xf32>
    %406 = arith.negf %405 : vector<8x16xf32>
    %407 = math.exp %406 : vector<8x16xf32>
    %cst_61 = arith.constant 1.000000e+00 : f32
    %408 = vector.broadcast %cst_61 : f32 to vector<8x16xf32>
    %409 = arith.addf %408, %407 : vector<8x16xf32>
    %410 = arith.divf %408, %409 : vector<8x16xf32>
    %411 = vector.extract_strided_slice %389 {offsets = [0, 32], sizes = [8, 16], strides = [1, 1]} : vector<8x96xf32> to vector<8x16xf32>
    %412 = vector.extract_strided_slice %394 {offsets = [0, 32], sizes = [8, 16], strides = [1, 1]} : vector<8x96xf32> to vector<8x16xf32>
    %413 = arith.mulf %402, %412 : vector<8x16xf32>
    %414 = arith.addf %411, %413 : vector<8x16xf32>
    %415 = math.tanh %414 : vector<8x16xf32>
    %cst_62 = arith.constant 1.000000e+00 : f32
    %416 = vector.broadcast %cst_62 : f32 to vector<8x16xf32>
    %417 = arith.subf %416, %410 : vector<8x16xf32>
    %418 = arith.mulf %417, %415 : vector<8x16xf32>
    %419 = arith.mulf %410, %351 : vector<8x16xf32>
    %420 = arith.addf %418, %419 : vector<8x16xf32>
    %421 = vector.shape_cast %22 : vector<8x1xi1> to vector<8x1xi1>
    %422 = vector.broadcast %421 : vector<8x1xi1> to vector<8x16xi1>
    %423 = arith.select %422, %420, %351 : vector<8x16xi1>, vector<8x16xf32>
    %cst_63 = arith.constant 0.000000e+00 : f32
    %424 = vector.shape_cast %22 : vector<8x1xi1> to vector<8x1xi1>
    %425 = vector.broadcast %424 : vector<8x1xi1> to vector<8x16xi1>
    %426 = vector.broadcast %cst_63 : f32 to vector<8x16xf32>
    %427 = arith.select %425, %423, %426 : vector<8x16xi1>, vector<8x16xf32>
    %428 = vector.extract_strided_slice %390 {offsets = [0, 48], sizes = [8, 16], strides = [1, 1]} : vector<8x96xf32> to vector<8x16xf32>
    %429 = vector.extract_strided_slice %394 {offsets = [0, 48], sizes = [8, 16], strides = [1, 1]} : vector<8x96xf32> to vector<8x16xf32>
    %430 = arith.addf %428, %429 : vector<8x16xf32>
    %431 = arith.negf %430 : vector<8x16xf32>
    %432 = math.exp %431 : vector<8x16xf32>
    %cst_64 = arith.constant 1.000000e+00 : f32
    %433 = vector.broadcast %cst_64 : f32 to vector<8x16xf32>
    %434 = arith.addf %433, %432 : vector<8x16xf32>
    %435 = arith.divf %433, %434 : vector<8x16xf32>
    %436 = vector.extract_strided_slice %390 {offsets = [0, 64], sizes = [8, 16], strides = [1, 1]} : vector<8x96xf32> to vector<8x16xf32>
    %437 = vector.extract_strided_slice %394 {offsets = [0, 64], sizes = [8, 16], strides = [1, 1]} : vector<8x96xf32> to vector<8x16xf32>
    %438 = arith.addf %436, %437 : vector<8x16xf32>
    %439 = arith.negf %438 : vector<8x16xf32>
    %440 = math.exp %439 : vector<8x16xf32>
    %cst_65 = arith.constant 1.000000e+00 : f32
    %441 = vector.broadcast %cst_65 : f32 to vector<8x16xf32>
    %442 = arith.addf %441, %440 : vector<8x16xf32>
    %443 = arith.divf %441, %442 : vector<8x16xf32>
    %444 = vector.extract_strided_slice %390 {offsets = [0, 80], sizes = [8, 16], strides = [1, 1]} : vector<8x96xf32> to vector<8x16xf32>
    %445 = vector.extract_strided_slice %394 {offsets = [0, 80], sizes = [8, 16], strides = [1, 1]} : vector<8x96xf32> to vector<8x16xf32>
    %446 = arith.mulf %435, %445 : vector<8x16xf32>
    %447 = arith.addf %444, %446 : vector<8x16xf32>
    %448 = math.tanh %447 : vector<8x16xf32>
    %cst_66 = arith.constant 1.000000e+00 : f32
    %449 = vector.broadcast %cst_66 : f32 to vector<8x16xf32>
    %450 = arith.subf %449, %443 : vector<8x16xf32>
    %451 = arith.mulf %450, %448 : vector<8x16xf32>
    %452 = arith.mulf %443, %384 : vector<8x16xf32>
    %453 = arith.addf %451, %452 : vector<8x16xf32>
    %454 = vector.shape_cast %16 : vector<8x1xi1> to vector<8x1xi1>
    %455 = vector.broadcast %454 : vector<8x1xi1> to vector<8x16xi1>
    %456 = arith.select %455, %453, %384 : vector<8x16xi1>, vector<8x16xf32>
    %cst_67 = arith.constant 0.000000e+00 : f32
    %457 = vector.shape_cast %16 : vector<8x1xi1> to vector<8x1xi1>
    %458 = vector.broadcast %457 : vector<8x1xi1> to vector<8x16xi1>
    %459 = vector.broadcast %cst_67 : f32 to vector<8x16xf32>
    %460 = arith.select %458, %456, %459 : vector<8x16xi1>, vector<8x16xf32>
    %461 = vector.extract_strided_slice %5 {offsets = [48, 0], sizes = [8, 96], strides = [1, 1]} : vector<64x96xf32> to vector<8x96xf32>
    %462 = vector.extract_strided_slice %5 {offsets = [8, 0], sizes = [8, 96], strides = [1, 1]} : vector<64x96xf32> to vector<8x96xf32>
    %463 = tpu.concatenate %423, %456 in 1 : vector<8x16xf32>, vector<8x16xf32> -> vector<8x32xf32>
    %cst_68 = arith.constant dense<0.000000e+00> : vector<8x96xf32>
    %464 = tpu.matmul %463, %6, %cst_68 {dimension_numbers = #tpu.dot_dimension_numbers<[1], [0], [0], [1], [0, 0, 1, 1], [], []>} : vector<8x32xf32>, vector<32x96xf32>, vector<8x96xf32> -> vector<8x96xf32>
    %465 = vector.broadcast %9 : vector<1x96xf32> to vector<8x96xf32>
    %466 = arith.addf %464, %465 : vector<8x96xf32>
    %467 = vector.extract_strided_slice %461 {offsets = [0, 0], sizes = [8, 16], strides = [1, 1]} : vector<8x96xf32> to vector<8x16xf32>
    %468 = vector.extract_strided_slice %466 {offsets = [0, 0], sizes = [8, 16], strides = [1, 1]} : vector<8x96xf32> to vector<8x16xf32>
    %469 = arith.addf %467, %468 : vector<8x16xf32>
    %470 = arith.negf %469 : vector<8x16xf32>
    %471 = math.exp %470 : vector<8x16xf32>
    %cst_69 = arith.constant 1.000000e+00 : f32
    %472 = vector.broadcast %cst_69 : f32 to vector<8x16xf32>
    %473 = arith.addf %472, %471 : vector<8x16xf32>
    %474 = arith.divf %472, %473 : vector<8x16xf32>
    %475 = vector.extract_strided_slice %461 {offsets = [0, 16], sizes = [8, 16], strides = [1, 1]} : vector<8x96xf32> to vector<8x16xf32>
    %476 = vector.extract_strided_slice %466 {offsets = [0, 16], sizes = [8, 16], strides = [1, 1]} : vector<8x96xf32> to vector<8x16xf32>
    %477 = arith.addf %475, %476 : vector<8x16xf32>
    %478 = arith.negf %477 : vector<8x16xf32>
    %479 = math.exp %478 : vector<8x16xf32>
    %cst_70 = arith.constant 1.000000e+00 : f32
    %480 = vector.broadcast %cst_70 : f32 to vector<8x16xf32>
    %481 = arith.addf %480, %479 : vector<8x16xf32>
    %482 = arith.divf %480, %481 : vector<8x16xf32>
    %483 = vector.extract_strided_slice %461 {offsets = [0, 32], sizes = [8, 16], strides = [1, 1]} : vector<8x96xf32> to vector<8x16xf32>
    %484 = vector.extract_strided_slice %466 {offsets = [0, 32], sizes = [8, 16], strides = [1, 1]} : vector<8x96xf32> to vector<8x16xf32>
    %485 = arith.mulf %474, %484 : vector<8x16xf32>
    %486 = arith.addf %483, %485 : vector<8x16xf32>
    %487 = math.tanh %486 : vector<8x16xf32>
    %cst_71 = arith.constant 1.000000e+00 : f32
    %488 = vector.broadcast %cst_71 : f32 to vector<8x16xf32>
    %489 = arith.subf %488, %482 : vector<8x16xf32>
    %490 = arith.mulf %489, %487 : vector<8x16xf32>
    %491 = arith.mulf %482, %423 : vector<8x16xf32>
    %492 = arith.addf %490, %491 : vector<8x16xf32>
    %493 = vector.shape_cast %24 : vector<8x1xi1> to vector<8x1xi1>
    %494 = vector.broadcast %493 : vector<8x1xi1> to vector<8x16xi1>
    %495 = arith.select %494, %492, %423 : vector<8x16xi1>, vector<8x16xf32>
    %cst_72 = arith.constant 0.000000e+00 : f32
    %496 = vector.shape_cast %24 : vector<8x1xi1> to vector<8x1xi1>
    %497 = vector.broadcast %496 : vector<8x1xi1> to vector<8x16xi1>
    %498 = vector.broadcast %cst_72 : f32 to vector<8x16xf32>
    %499 = arith.select %497, %495, %498 : vector<8x16xi1>, vector<8x16xf32>
    %500 = vector.extract_strided_slice %462 {offsets = [0, 48], sizes = [8, 16], strides = [1, 1]} : vector<8x96xf32> to vector<8x16xf32>
    %501 = vector.extract_strided_slice %466 {offsets = [0, 48], sizes = [8, 16], strides = [1, 1]} : vector<8x96xf32> to vector<8x16xf32>
    %502 = arith.addf %500, %501 : vector<8x16xf32>
    %503 = arith.negf %502 : vector<8x16xf32>
    %504 = math.exp %503 : vector<8x16xf32>
    %cst_73 = arith.constant 1.000000e+00 : f32
    %505 = vector.broadcast %cst_73 : f32 to vector<8x16xf32>
    %506 = arith.addf %505, %504 : vector<8x16xf32>
    %507 = arith.divf %505, %506 : vector<8x16xf32>
    %508 = vector.extract_strided_slice %462 {offsets = [0, 64], sizes = [8, 16], strides = [1, 1]} : vector<8x96xf32> to vector<8x16xf32>
    %509 = vector.extract_strided_slice %466 {offsets = [0, 64], sizes = [8, 16], strides = [1, 1]} : vector<8x96xf32> to vector<8x16xf32>
    %510 = arith.addf %508, %509 : vector<8x16xf32>
    %511 = arith.negf %510 : vector<8x16xf32>
    %512 = math.exp %511 : vector<8x16xf32>
    %cst_74 = arith.constant 1.000000e+00 : f32
    %513 = vector.broadcast %cst_74 : f32 to vector<8x16xf32>
    %514 = arith.addf %513, %512 : vector<8x16xf32>
    %515 = arith.divf %513, %514 : vector<8x16xf32>
    %516 = vector.extract_strided_slice %462 {offsets = [0, 80], sizes = [8, 16], strides = [1, 1]} : vector<8x96xf32> to vector<8x16xf32>
    %517 = vector.extract_strided_slice %466 {offsets = [0, 80], sizes = [8, 16], strides = [1, 1]} : vector<8x96xf32> to vector<8x16xf32>
    %518 = arith.mulf %507, %517 : vector<8x16xf32>
    %519 = arith.addf %516, %518 : vector<8x16xf32>
    %520 = math.tanh %519 : vector<8x16xf32>
    %cst_75 = arith.constant 1.000000e+00 : f32
    %521 = vector.broadcast %cst_75 : f32 to vector<8x16xf32>
    %522 = arith.subf %521, %515 : vector<8x16xf32>
    %523 = arith.mulf %522, %520 : vector<8x16xf32>
    %524 = arith.mulf %515, %456 : vector<8x16xf32>
    %525 = arith.addf %523, %524 : vector<8x16xf32>
    %526 = vector.shape_cast %14 : vector<8x1xi1> to vector<8x1xi1>
    %527 = vector.broadcast %526 : vector<8x1xi1> to vector<8x16xi1>
    %528 = arith.select %527, %525, %456 : vector<8x16xi1>, vector<8x16xf32>
    %cst_76 = arith.constant 0.000000e+00 : f32
    %529 = vector.shape_cast %14 : vector<8x1xi1> to vector<8x1xi1>
    %530 = vector.broadcast %529 : vector<8x1xi1> to vector<8x16xi1>
    %531 = vector.broadcast %cst_76 : f32 to vector<8x16xf32>
    %532 = arith.select %530, %528, %531 : vector<8x16xi1>, vector<8x16xf32>
    %533 = vector.extract_strided_slice %5 {offsets = [56, 0], sizes = [8, 96], strides = [1, 1]} : vector<64x96xf32> to vector<8x96xf32>
    %534 = vector.extract_strided_slice %5 {offsets = [0, 0], sizes = [8, 96], strides = [1, 1]} : vector<64x96xf32> to vector<8x96xf32>
    %535 = tpu.concatenate %495, %528 in 1 : vector<8x16xf32>, vector<8x16xf32> -> vector<8x32xf32>
    %cst_77 = arith.constant dense<0.000000e+00> : vector<8x96xf32>
    %536 = tpu.matmul %535, %6, %cst_77 {dimension_numbers = #tpu.dot_dimension_numbers<[1], [0], [0], [1], [0, 0, 1, 1], [], []>} : vector<8x32xf32>, vector<32x96xf32>, vector<8x96xf32> -> vector<8x96xf32>
    %537 = vector.broadcast %9 : vector<1x96xf32> to vector<8x96xf32>
    %538 = arith.addf %536, %537 : vector<8x96xf32>
    %539 = vector.extract_strided_slice %533 {offsets = [0, 0], sizes = [8, 16], strides = [1, 1]} : vector<8x96xf32> to vector<8x16xf32>
    %540 = vector.extract_strided_slice %538 {offsets = [0, 0], sizes = [8, 16], strides = [1, 1]} : vector<8x96xf32> to vector<8x16xf32>
    %541 = arith.addf %539, %540 : vector<8x16xf32>
    %542 = arith.negf %541 : vector<8x16xf32>
    %543 = math.exp %542 : vector<8x16xf32>
    %cst_78 = arith.constant 1.000000e+00 : f32
    %544 = vector.broadcast %cst_78 : f32 to vector<8x16xf32>
    %545 = arith.addf %544, %543 : vector<8x16xf32>
    %546 = arith.divf %544, %545 : vector<8x16xf32>
    %547 = vector.extract_strided_slice %533 {offsets = [0, 16], sizes = [8, 16], strides = [1, 1]} : vector<8x96xf32> to vector<8x16xf32>
    %548 = vector.extract_strided_slice %538 {offsets = [0, 16], sizes = [8, 16], strides = [1, 1]} : vector<8x96xf32> to vector<8x16xf32>
    %549 = arith.addf %547, %548 : vector<8x16xf32>
    %550 = arith.negf %549 : vector<8x16xf32>
    %551 = math.exp %550 : vector<8x16xf32>
    %cst_79 = arith.constant 1.000000e+00 : f32
    %552 = vector.broadcast %cst_79 : f32 to vector<8x16xf32>
    %553 = arith.addf %552, %551 : vector<8x16xf32>
    %554 = arith.divf %552, %553 : vector<8x16xf32>
    %555 = vector.extract_strided_slice %533 {offsets = [0, 32], sizes = [8, 16], strides = [1, 1]} : vector<8x96xf32> to vector<8x16xf32>
    %556 = vector.extract_strided_slice %538 {offsets = [0, 32], sizes = [8, 16], strides = [1, 1]} : vector<8x96xf32> to vector<8x16xf32>
    %557 = arith.mulf %546, %556 : vector<8x16xf32>
    %558 = arith.addf %555, %557 : vector<8x16xf32>
    %559 = math.tanh %558 : vector<8x16xf32>
    %cst_80 = arith.constant 1.000000e+00 : f32
    %560 = vector.broadcast %cst_80 : f32 to vector<8x16xf32>
    %561 = arith.subf %560, %554 : vector<8x16xf32>
    %562 = arith.mulf %561, %559 : vector<8x16xf32>
    %563 = arith.mulf %554, %495 : vector<8x16xf32>
    %564 = arith.addf %562, %563 : vector<8x16xf32>
    %565 = vector.shape_cast %26 : vector<8x1xi1> to vector<8x1xi1>
    %566 = vector.broadcast %565 : vector<8x1xi1> to vector<8x16xi1>
    %567 = arith.select %566, %564, %495 : vector<8x16xi1>, vector<8x16xf32>
    %cst_81 = arith.constant 0.000000e+00 : f32
    %568 = vector.shape_cast %26 : vector<8x1xi1> to vector<8x1xi1>
    %569 = vector.broadcast %568 : vector<8x1xi1> to vector<8x16xi1>
    %570 = vector.broadcast %cst_81 : f32 to vector<8x16xf32>
    %571 = arith.select %569, %567, %570 : vector<8x16xi1>, vector<8x16xf32>
    %572 = vector.extract_strided_slice %534 {offsets = [0, 48], sizes = [8, 16], strides = [1, 1]} : vector<8x96xf32> to vector<8x16xf32>
    %573 = vector.extract_strided_slice %538 {offsets = [0, 48], sizes = [8, 16], strides = [1, 1]} : vector<8x96xf32> to vector<8x16xf32>
    %574 = arith.addf %572, %573 : vector<8x16xf32>
    %575 = arith.negf %574 : vector<8x16xf32>
    %576 = math.exp %575 : vector<8x16xf32>
    %cst_82 = arith.constant 1.000000e+00 : f32
    %577 = vector.broadcast %cst_82 : f32 to vector<8x16xf32>
    %578 = arith.addf %577, %576 : vector<8x16xf32>
    %579 = arith.divf %577, %578 : vector<8x16xf32>
    %580 = vector.extract_strided_slice %534 {offsets = [0, 64], sizes = [8, 16], strides = [1, 1]} : vector<8x96xf32> to vector<8x16xf32>
    %581 = vector.extract_strided_slice %538 {offsets = [0, 64], sizes = [8, 16], strides = [1, 1]} : vector<8x96xf32> to vector<8x16xf32>
    %582 = arith.addf %580, %581 : vector<8x16xf32>
    %583 = arith.negf %582 : vector<8x16xf32>
    %584 = math.exp %583 : vector<8x16xf32>
    %cst_83 = arith.constant 1.000000e+00 : f32
    %585 = vector.broadcast %cst_83 : f32 to vector<8x16xf32>
    %586 = arith.addf %585, %584 : vector<8x16xf32>
    %587 = arith.divf %585, %586 : vector<8x16xf32>
    %588 = vector.extract_strided_slice %534 {offsets = [0, 80], sizes = [8, 16], strides = [1, 1]} : vector<8x96xf32> to vector<8x16xf32>
    %589 = vector.extract_strided_slice %538 {offsets = [0, 80], sizes = [8, 16], strides = [1, 1]} : vector<8x96xf32> to vector<8x16xf32>
    %590 = arith.mulf %579, %589 : vector<8x16xf32>
    %591 = arith.addf %588, %590 : vector<8x16xf32>
    %592 = math.tanh %591 : vector<8x16xf32>
    %cst_84 = arith.constant 1.000000e+00 : f32
    %593 = vector.broadcast %cst_84 : f32 to vector<8x16xf32>
    %594 = arith.subf %593, %587 : vector<8x16xf32>
    %595 = arith.mulf %594, %592 : vector<8x16xf32>
    %596 = arith.mulf %587, %528 : vector<8x16xf32>
    %597 = arith.addf %595, %596 : vector<8x16xf32>
    %598 = vector.shape_cast %12 : vector<8x1xi1> to vector<8x1xi1>
    %599 = vector.broadcast %598 : vector<8x1xi1> to vector<8x16xi1>
    %600 = arith.select %599, %597, %528 : vector<8x16xi1>, vector<8x16xf32>
    %cst_85 = arith.constant 0.000000e+00 : f32
    %601 = vector.shape_cast %12 : vector<8x1xi1> to vector<8x1xi1>
    %602 = vector.broadcast %601 : vector<8x1xi1> to vector<8x16xi1>
    %603 = vector.broadcast %cst_85 : f32 to vector<8x16xf32>
    %604 = arith.select %602, %600, %603 : vector<8x16xi1>, vector<8x16xf32>
    %605 = tpu.concatenate %67, %604 in 1 : vector<8x16xf32>, vector<8x16xf32> -> vector<8x32xf32>
    %606 = tpu.concatenate %139, %532 in 1 : vector<8x16xf32>, vector<8x16xf32> -> vector<8x32xf32>
    %607 = tpu.concatenate %211, %460 in 1 : vector<8x16xf32>, vector<8x16xf32> -> vector<8x32xf32>
    %608 = tpu.concatenate %283, %388 in 1 : vector<8x16xf32>, vector<8x16xf32> -> vector<8x32xf32>
    %609 = tpu.concatenate %355, %316 in 1 : vector<8x16xf32>, vector<8x16xf32> -> vector<8x32xf32>
    %610 = tpu.concatenate %427, %244 in 1 : vector<8x16xf32>, vector<8x16xf32> -> vector<8x32xf32>
    %611 = tpu.concatenate %499, %172 in 1 : vector<8x16xf32>, vector<8x16xf32> -> vector<8x32xf32>
    %612 = tpu.concatenate %571, %100 in 1 : vector<8x16xf32>, vector<8x16xf32> -> vector<8x32xf32>
    %613 = vector.extract_strided_slice %605 {offsets = [0, 0], sizes = [1, 32], strides = [1, 1]} : vector<8x32xf32> to vector<1x32xf32>
    %614 = vector.extract_strided_slice %605 {offsets = [2, 0], sizes = [1, 32], strides = [1, 1]} : vector<8x32xf32> to vector<1x32xf32>
    %615 = vector.extract_strided_slice %606 {offsets = [0, 0], sizes = [1, 32], strides = [1, 1]} : vector<8x32xf32> to vector<1x32xf32>
    %616 = vector.extract_strided_slice %606 {offsets = [2, 0], sizes = [1, 32], strides = [1, 1]} : vector<8x32xf32> to vector<1x32xf32>
    %617 = vector.extract_strided_slice %607 {offsets = [0, 0], sizes = [1, 32], strides = [1, 1]} : vector<8x32xf32> to vector<1x32xf32>
    %618 = vector.extract_strided_slice %607 {offsets = [2, 0], sizes = [1, 32], strides = [1, 1]} : vector<8x32xf32> to vector<1x32xf32>
    %619 = vector.extract_strided_slice %608 {offsets = [0, 0], sizes = [1, 32], strides = [1, 1]} : vector<8x32xf32> to vector<1x32xf32>
    %620 = vector.extract_strided_slice %608 {offsets = [2, 0], sizes = [1, 32], strides = [1, 1]} : vector<8x32xf32> to vector<1x32xf32>
    %621 = vector.extract_strided_slice %609 {offsets = [0, 0], sizes = [1, 32], strides = [1, 1]} : vector<8x32xf32> to vector<1x32xf32>
    %622 = vector.extract_strided_slice %609 {offsets = [2, 0], sizes = [1, 32], strides = [1, 1]} : vector<8x32xf32> to vector<1x32xf32>
    %623 = vector.extract_strided_slice %610 {offsets = [0, 0], sizes = [1, 32], strides = [1, 1]} : vector<8x32xf32> to vector<1x32xf32>
    %624 = vector.extract_strided_slice %610 {offsets = [2, 0], sizes = [1, 32], strides = [1, 1]} : vector<8x32xf32> to vector<1x32xf32>
    %625 = vector.extract_strided_slice %611 {offsets = [0, 0], sizes = [1, 32], strides = [1, 1]} : vector<8x32xf32> to vector<1x32xf32>
    %626 = vector.extract_strided_slice %611 {offsets = [2, 0], sizes = [1, 32], strides = [1, 1]} : vector<8x32xf32> to vector<1x32xf32>
    %627 = vector.extract_strided_slice %612 {offsets = [0, 0], sizes = [1, 32], strides = [1, 1]} : vector<8x32xf32> to vector<1x32xf32>
    %628 = vector.extract_strided_slice %612 {offsets = [2, 0], sizes = [1, 32], strides = [1, 1]} : vector<8x32xf32> to vector<1x32xf32>
    %629 = vector.extract_strided_slice %605 {offsets = [1, 0], sizes = [1, 32], strides = [1, 1]} : vector<8x32xf32> to vector<1x32xf32>
    %630 = vector.extract_strided_slice %605 {offsets = [3, 0], sizes = [1, 32], strides = [1, 1]} : vector<8x32xf32> to vector<1x32xf32>
    %631 = vector.extract_strided_slice %606 {offsets = [1, 0], sizes = [1, 32], strides = [1, 1]} : vector<8x32xf32> to vector<1x32xf32>
    %632 = vector.extract_strided_slice %606 {offsets = [3, 0], sizes = [1, 32], strides = [1, 1]} : vector<8x32xf32> to vector<1x32xf32>
    %633 = vector.extract_strided_slice %607 {offsets = [1, 0], sizes = [1, 32], strides = [1, 1]} : vector<8x32xf32> to vector<1x32xf32>
    %634 = vector.extract_strided_slice %607 {offsets = [3, 0], sizes = [1, 32], strides = [1, 1]} : vector<8x32xf32> to vector<1x32xf32>
    %635 = vector.extract_strided_slice %608 {offsets = [1, 0], sizes = [1, 32], strides = [1, 1]} : vector<8x32xf32> to vector<1x32xf32>
    %636 = vector.extract_strided_slice %608 {offsets = [3, 0], sizes = [1, 32], strides = [1, 1]} : vector<8x32xf32> to vector<1x32xf32>
    %637 = vector.extract_strided_slice %609 {offsets = [1, 0], sizes = [1, 32], strides = [1, 1]} : vector<8x32xf32> to vector<1x32xf32>
    %638 = vector.extract_strided_slice %609 {offsets = [3, 0], sizes = [1, 32], strides = [1, 1]} : vector<8x32xf32> to vector<1x32xf32>
    %639 = vector.extract_strided_slice %610 {offsets = [1, 0], sizes = [1, 32], strides = [1, 1]} : vector<8x32xf32> to vector<1x32xf32>
    %640 = vector.extract_strided_slice %610 {offsets = [3, 0], sizes = [1, 32], strides = [1, 1]} : vector<8x32xf32> to vector<1x32xf32>
    %641 = vector.extract_strided_slice %611 {offsets = [1, 0], sizes = [1, 32], strides = [1, 1]} : vector<8x32xf32> to vector<1x32xf32>
    %642 = vector.extract_strided_slice %611 {offsets = [3, 0], sizes = [1, 32], strides = [1, 1]} : vector<8x32xf32> to vector<1x32xf32>
    %643 = vector.extract_strided_slice %612 {offsets = [1, 0], sizes = [1, 32], strides = [1, 1]} : vector<8x32xf32> to vector<1x32xf32>
    %644 = vector.extract_strided_slice %612 {offsets = [3, 0], sizes = [1, 32], strides = [1, 1]} : vector<8x32xf32> to vector<1x32xf32>
    %645 = tpu.concatenate %613, %615, %617, %619, %621, %623, %625, %627, %629, %631, %633, %635, %637, %639, %641, %643 in 0 : vector<1x32xf32>, vector<1x32xf32>, vector<1x32xf32>, vector<1x32xf32>, vector<1x32xf32>, vector<1x32xf32>, vector<1x32xf32>, vector<1x32xf32>, vector<1x32xf32>, vector<1x32xf32>, vector<1x32xf32>, vector<1x32xf32>, vector<1x32xf32>, vector<1x32xf32>, vector<1x32xf32>, vector<1x32xf32> -> vector<16x32xf32>
    %646 = tpu.concatenate %614, %616, %618, %620, %622, %624, %626, %628, %630, %632, %634, %636, %638, %640, %642, %644 in 0 : vector<1x32xf32>, vector<1x32xf32>, vector<1x32xf32>, vector<1x32xf32>, vector<1x32xf32>, vector<1x32xf32>, vector<1x32xf32>, vector<1x32xf32>, vector<1x32xf32>, vector<1x32xf32>, vector<1x32xf32>, vector<1x32xf32>, vector<1x32xf32>, vector<1x32xf32>, vector<1x32xf32>, vector<1x32xf32> -> vector<16x32xf32>
    %cst_86 = arith.constant dense<0.000000e+00> : vector<16x16xf32>
    %647 = tpu.matmul %645, %646, %cst_86 {dimension_numbers = #tpu.dot_dimension_numbers<[1], [1], [0], [0], [0, 0, 1, 0], [], []>} : vector<16x32xf32>, vector<16x32xf32>, vector<16x16xf32> -> vector<16x16xf32>
    %648 = vector.extract_strided_slice %647 {offsets = [0, 0], sizes = [8, 8], strides = [1, 1]} : vector<16x16xf32> to vector<8x8xf32>
    %c0_87 = arith.constant 0 : index
    %c0_88 = arith.constant 0 : index
    %c0_89 = arith.constant 0 : index
    %649 = vector.load %arg6[%c0_87, %c0_88, %c0_89] : memref<2x8x8xf32, #tpu.memory_space<vmem>>, vector<1x8x8xf32>
    %650 = vector.shape_cast %649 : vector<1x8x8xf32> to vector<8x8xf32>
    %651 = vector.shape_cast %648 : vector<8x8xf32> to vector<1x8x8xf32>
    tpu.vector_store %arg6[%c0_87, %c0_88, %c0_89], %651 {strides = array<i32>} : memref<2x8x8xf32, #tpu.memory_space<vmem>>, vector<1x8x8xf32>,
    %652 = vector.extract_strided_slice %647 {offsets = [8, 8], sizes = [8, 8], strides = [1, 1]} : vector<16x16xf32> to vector<8x8xf32>
    %c1 = arith.constant 1 : index
    %c0_90 = arith.constant 0 : index
    %c0_91 = arith.constant 0 : index
    %653 = vector.load %arg6[%c1, %c0_90, %c0_91] : memref<2x8x8xf32, #tpu.memory_space<vmem>>, vector<1x8x8xf32>
    %654 = vector.shape_cast %653 : vector<1x8x8xf32> to vector<8x8xf32>
    %655 = vector.shape_cast %652 : vector<8x8xf32> to vector<1x8x8xf32>
    tpu.vector_store %arg6[%c1, %c0_90, %c0_91], %655 {strides = array<i32>} : memref<2x8x8xf32, #tpu.memory_space<vmem>>, vector<1x8x8xf32>,
    return
  }
}

</mosaic_0001>

<llo_original>
// kernel: tpu_custom_call.1
$region0: #{tpu_custom_call.1}
  #allocation0 [shape = 'u32[]', space=smem, size = 0x4, offset = 0x4, fixed_abs, tag = 'smem constant byte address 0x4 - core index']
  #allocation1 [shape = 'u32[144,128]{1,0:T(1,128)}', space=vmem, size = 0x12000, scoped, tag = 'internal scratch']
  %s0 = inlined_call_operand.vmem [shape: f32[64,32], index: 0, kind: input, shape index: {}]
  %s1 = inlined_call_operand.vmem [shape: s32[8,1], index: 1, kind: input, shape index: {}]
  %s2 = inlined_call_operand.vmem [shape: f32[32,96], index: 2, kind: input, shape index: {}]
  %s3 = inlined_call_operand.vmem [shape: f32[1,96], index: 3, kind: input, shape index: {}]
  %s4 = inlined_call_operand.vmem [shape: f32[32,96], index: 4, kind: input, shape index: {}]
  %s5 = inlined_call_operand.vmem [shape: f32[1,96], index: 5, kind: input, shape index: {}]
  %s6 = inlined_call_operand.hbm [shape: f32[2,8,8], index: 6, kind: output, shape index: {}]
  %s7 = sld [smem:[#allocation0]]
  $region34: #{tpu_custom_call.1} parent=0
    _
  %s9 = ssub.s32 1, %s7
  %s10 = scalar_select 0, %s9, %s7
  $region1: #{tpu_custom_call.1} parent=0
    #allocation2 [shape = 'u8[8192]{0}', space=vmem, size = 0x2000, scoped, tag = 'output window, operand 0, single buffered']
    #allocation3 [shape = 's32[1]{0}', space=sflag, size = 0x4, scoped, tag = 'scoped memory for tpu_custom_call.1']
    %11 = vsyncpa [#allocation3], 0
    // Predicated region
    $region2: #{tpu_custom_call.1} parent=1 // pred_check
      _
    $region3: #{tpu_custom_call.1} parent=1 // pred_check_branch
      %13 = sbr.rel (0) target = $region5
    $region4: #{tpu_custom_call.1} parent=1 // pred_region
      _
    $region5: #{tpu_custom_call.1} parent=1 // pred_fallthru
      _
    // Predicated region
    $region6: #{tpu_custom_call.1} parent=1 // pred_check
      _
    $region7: #{tpu_custom_call.1} parent=1 // pred_check_branch
      %15 = sbr.rel (0) target = $region9
    $region8: #{tpu_custom_call.1} parent=1 // pred_region
      _
    $region9: #{tpu_custom_call.1} parent=1 // pred_fallthru
      _
    // Predicated region
    $region10: #{tpu_custom_call.1} parent=1 // pred_check
      _
    $region11: #{tpu_custom_call.1} parent=1 // pred_check_branch
      %17 = sbr.rel (0) target = $region13
    $region12: #{tpu_custom_call.1} parent=1 // pred_region
      _
    $region13: #{tpu_custom_call.1} parent=1 // pred_fallthru
      _
    // Predicated region
    $region14: #{tpu_custom_call.1} parent=1 // pred_check
      _
    $region15: #{tpu_custom_call.1} parent=1 // pred_check_branch
      %19 = sbr.rel (0) target = $region17
    $region16: #{tpu_custom_call.1} parent=1 // pred_region
      _
    $region17: #{tpu_custom_call.1} parent=1 // pred_fallthru
      _
    // Predicated region
    $region18: #{tpu_custom_call.1} parent=1 // pred_check
      _
    $region19: #{tpu_custom_call.1} parent=1 // pred_check_branch
      %21 = sbr.rel (0) target = $region21
    $region20: #{tpu_custom_call.1} parent=1 // pred_region
      _
    $region21: #{tpu_custom_call.1} parent=1 // pred_fallthru
      _
    // Predicated region
    $region22: #{tpu_custom_call.1} parent=1 // pred_check
      _
    $region23: #{tpu_custom_call.1} parent=1 // pred_check_branch
      %23 = sbr.rel (0) target = $region25
    $region24: #{tpu_custom_call.1} parent=1 // pred_region
      _
    $region25: #{tpu_custom_call.1} parent=1 // pred_fallthru
      _
    %v24 = vld [vmem:[%s0] sm:$0xff]
    %v25 = vld [vmem:[%s0 + $0x8] sm:$0xff]
    %v26 = vld [vmem:[%s0 + $0x10] sm:$0xff]
    %v27 = vld [vmem:[%s0 + $0x18] sm:$0xff]
    %v28 = vld [vmem:[%s0 + $0x20] sm:$0xff]
    %v29 = vld [vmem:[%s0 + $0x28] sm:$0xff]
    %v30 = vld [vmem:[%s0 + $0x30] sm:$0xff]
    %v31 = vld [vmem:[%s0 + $0x38] sm:$0xff]
    %v32 = vld [vmem:[%s2] sm:$0xff]
    %v33 = vld [vmem:[%s2 + $0x8] sm:$0xff]
    %v34 = vld [vmem:[%s2 + $0x10] sm:$0xff]
    %v35 = vld [vmem:[%s2 + $0x18] sm:$0xff]
    %v36 = vld [vmem:[%s3] sm:$0x1]
    %v38 = vlaneseq
    %v39 = vshrl.u32 %v38, 7
    %v40 = vsub.s32 0, %v39
    %v41 = vrot.slane %v36, %v40
    %vm43 = vcmask 261120
    %v45 = vsel %vm43, %v24, 0
    %v48 = vsel %vm43, %v25, 0
    %v51 = vsel %vm43, %v26, 0
    %v54 = vsel %vm43, %v27, 0
    %v57 = vsel %vm43, %v28, 0
    %v60 = vsel %vm43, %v29, 0
    %v63 = vsel %vm43, %v30, 0
    %v66 = vsel %vm43, %v31, 0
    %68 = vmatprep.subr.mxu0 0.0
    %69 = vmatpush1.msra.mxu0 %v32
    %70 = vmatprep.subr.mxu0 0.0
    %71 = vmatpush1.msra.mxu0 %v33
    %72 = vmatprep.subr.mxu0 0.0
    %73 = vmatpush1.msra.mxu0 %v34
    %74 = vmatprep.subr.mxu0 0.0
    %75 = vmatpush1.msra.mxu0 %v35
    %76 = vmatprep.subr.mxu0 0.0
    %77 = vmatpush1.msra.mxu0 0.0
    %78 = vmatprep.subr.mxu0 0.0
    %79 = vmatpush1.msra.mxu0 0.0
    %80 = vmatprep.subr.mxu0 0.0
    %81 = vmatpush1.msra.mxu0 0.0
    %82 = vmatprep.subr.mxu0 0.0
    %83 = vmatpush1.msra.mxu0 0.0
    %84 = vmatprep.subr.mxu0 0.0
    %85 = vmatpush1.msra.mxu0 0.0
    %86 = vmatprep.subr.mxu0 0.0
    %87 = vmatpush1.msra.mxu0 0.0
    %88 = vmatprep.subr.mxu0 0.0
    %89 = vmatpush1.msra.mxu0 0.0
    %90 = vmatprep.subr.mxu0 0.0
    %91 = vmatpush1.msra.mxu0 0.0
    %92 = vmatprep.subr.mxu0 0.0
    %93 = vmatpush1.msra.mxu0 0.0
    %94 = vmatprep.subr.mxu0 0.0
    %95 = vmatpush1.msra.mxu0 0.0
    %96 = vmatprep.subr.mxu0 0.0
    %97 = vmatpush1.msra.mxu0 0.0
    %98 = vmatprep.subr.mxu0 0.0
    %99 = vmatpush1.msra.mxu0 0.0
    %100 = vmatprep.subr.mxu0 0.0
    %101 = vmatpush1.msra.mxu0 0.0
    %102 = vmatprep.subr.mxu0 0.0
    %103 = vmatpush1.msra.mxu0 0.0
    %104 = vmatprep.subr.mxu0 0.0
    %105 = vmatpush1.msra.mxu0 0.0
    %106 = vmatprep.subr.mxu0 0.0
    %107 = vmatpush1.msra.mxu0 0.0
    %108 = vmatprep.subr.mxu0 0.0
    %109 = vmatpush1.msra.mxu0 0.0
    %110 = vmatprep.subr.mxu0 0.0
    %111 = vmatpush1.msra.mxu0 0.0
    %112 = vmatprep.subr.mxu0 0.0
    %113 = vmatpush1.msra.mxu0 0.0
    %114 = vmatprep.subr.mxu0 0.0
    %115 = vmatpush1.msra.mxu0 0.0
    %116 = vmatprep.subr.mxu0 0.0
    %117 = vmatpush1.msra.mxu0 0.0
    %118 = vmatprep.subr.mxu0 0.0
    %119 = vmatpush1.msra.mxu0 0.0
    %120 = vmatprep.subr.mxu0 0.0
    %121 = vmatpush1.msra.mxu0 0.0
    %122 = vmatprep.subr.mxu0 0.0
    %123 = vmatpush1.msra.mxu0 0.0
    %124 = vmatprep.subr.mxu0 0.0
    %125 = vmatpush1.msra.mxu0 0.0
    %126 = vmatprep.subr.mxu0 0.0
    %127 = vmatpush1.msra.mxu0 0.0
    %128 = vmatprep.subr.mxu0 0.0
    %129 = vmatpush1.msra.mxu0 0.0
    %130 = vmatprep.subr.mxu0 0.0
    %131 = vmatpush1.msra.mxu0 0.0
    %132 = vmatprep.mubr.f32.mxu0 0.0
    %133 = vmatmul.mubr.f32.gmra.mrb[0].mxu0 %v45
    %v134 = vpop.f32.mrb[0].mxu0
    %v135 = vadd.f32 %v41, %v134
    %v136 = vpop.f32.mrb[0].mxu0
    %137 = vmatprep.mubr.f32.mxu0 0.0
    %138 = vmatmul.mubr.f32.gmra.mrb[0].mxu0 %v48
    %v139 = vpop.f32.mrb[0].mxu0
    %v140 = vadd.f32 %v41, %v139
    %v141 = vpop.f32.mrb[0].mxu0
    %142 = vmatprep.mubr.f32.mxu0 0.0
    %143 = vmatmul.mubr.f32.gmra.mrb[0].mxu0 %v51
    %v144 = vpop.f32.mrb[0].mxu0
    %v145 = vadd.f32 %v41, %v144
    %v146 = vpop.f32.mrb[0].mxu0
    %147 = vmatprep.mubr.f32.mxu0 0.0
    %148 = vmatmul.mubr.f32.gmra.mrb[0].mxu0 %v54
    %v149 = vpop.f32.mrb[0].mxu0
    %v150 = vadd.f32 %v41, %v149
    %v151 = vpop.f32.mrb[0].mxu0
    %152 = vmatprep.mubr.f32.mxu0 0.0
    %153 = vmatmul.mubr.f32.gmra.mrb[0].mxu0 %v57
    %v154 = vpop.f32.mrb[0].mxu0
    %v155 = vadd.f32 %v41, %v154
    %v156 = vpop.f32.mrb[0].mxu0
    %157 = vmatprep.mubr.f32.mxu0 0.0
    %158 = vmatmul.mubr.f32.gmra.mrb[0].mxu0 %v60
    %v159 = vpop.f32.mrb[0].mxu0
    %v160 = vadd.f32 %v41, %v159
    %v161 = vpop.f32.mrb[0].mxu0
    %162 = vmatprep.mubr.f32.mxu0 0.0
    %163 = vmatmul.mubr.f32.gmra.mrb[0].mxu0 %v63
    %v164 = vpop.f32.mrb[0].mxu0
    %v165 = vadd.f32 %v41, %v164
    %v166 = vpop.f32.mrb[0].mxu0
    %167 = vmatprep.mubr.f32.mxu0 0.0
    %168 = vmatmul.mubr.f32.gmra.mrb[0].mxu0 %v66
    %v169 = vpop.f32.mrb[0].mxu0
    %v170 = vadd.f32 %v41, %v169
    %v171 = vpop.f32.mrb[0].mxu0
    %172 = vdwg.mxu0
    %v173 = vld [vmem:[%s4] sm:$0xff]
    %v174 = vld [vmem:[%s4 + $0x8] sm:$0xff]
    %v175 = vld [vmem:[%s4 + $0x10] sm:$0xff]
    %v176 = vld [vmem:[%s4 + $0x18] sm:$0xff]
    %v177 = vld [vmem:[%s5] sm:$0x1]
    %v178 = vadd.f32 %v177, 0.0
    %v179 = vld [vmem:[%s1] sm:$0xff]
    %vm180 = vcmp.gt.s32.totalorder %v179, 0
    %vm181 = vcmp.gt.s32.totalorder %v179, 1
    %vm182 = vcmp.gt.s32.totalorder %v179, 2
    %vm183 = vcmp.gt.s32.totalorder %v179, 3
    %vm184 = vcmp.gt.s32.totalorder %v179, 4
    %vm185 = vcmp.gt.s32.totalorder %v179, 5
    %vm186 = vcmp.gt.s32.totalorder %v179, 6
    %vm187 = vcmp.gt.s32.totalorder %v179, 7
    %v189 = vlaneseq
    %v190 = vshrl.u32 %v189, 7
    %v191 = vsub.s32 0, %v190
    %v192 = vrot.slane %v178, %v191
    %v195 = vsel %vm43, 0.0, 0
    %197 = vmatprep.subr.mxu0 0.0
    %198 = vmatpush1.msra.mxu0 %v173
    %199 = vmatprep.subr.mxu0 0.0
    %200 = vmatpush1.msra.mxu0 %v174
    %201 = vmatprep.subr.mxu0 0.0
    %202 = vmatpush1.msra.mxu0 %v175
    %203 = vmatprep.subr.mxu0 0.0
    %204 = vmatpush1.msra.mxu0 %v176
    %205 = vmatprep.subr.mxu0 0.0
    %206 = vmatpush1.msra.mxu0 0.0
    %207 = vmatprep.subr.mxu0 0.0
    %208 = vmatpush1.msra.mxu0 0.0
    %209 = vmatprep.subr.mxu0 0.0
    %210 = vmatpush1.msra.mxu0 0.0
    %211 = vmatprep.subr.mxu0 0.0
    %212 = vmatpush1.msra.mxu0 0.0
    %213 = vmatprep.subr.mxu0 0.0
    %214 = vmatpush1.msra.mxu0 0.0
    %215 = vmatprep.subr.mxu0 0.0
    %216 = vmatpush1.msra.mxu0 0.0
    %217 = vmatprep.subr.mxu0 0.0
    %218 = vmatpush1.msra.mxu0 0.0
    %219 = vmatprep.subr.mxu0 0.0
    %220 = vmatpush1.msra.mxu0 0.0
    %221 = vmatprep.subr.mxu0 0.0
    %222 = vmatpush1.msra.mxu0 0.0
    %223 = vmatprep.subr.mxu0 0.0
    %224 = vmatpush1.msra.mxu0 0.0
    %225 = vmatprep.subr.mxu0 0.0
    %226 = vmatpush1.msra.mxu0 0.0
    %227 = vmatprep.subr.mxu0 0.0
    %228 = vmatpush1.msra.mxu0 0.0
    %229 = vmatprep.subr.mxu0 0.0
    %230 = vmatpush1.msra.mxu0 0.0
    %231 = vmatprep.subr.mxu0 0.0
    %232 = vmatpush1.msra.mxu0 0.0
    %233 = vmatprep.subr.mxu0 0.0
    %234 = vmatpush1.msra.mxu0 0.0
    %235 = vmatprep.subr.mxu0 0.0
    %236 = vmatpush1.msra.mxu0 0.0
    %237 = vmatprep.subr.mxu0 0.0
    %238 = vmatpush1.msra.mxu0 0.0
    %239 = vmatprep.subr.mxu0 0.0
    %240 = vmatpush1.msra.mxu0 0.0
    %241 = vmatprep.subr.mxu0 0.0
    %242 = vmatpush1.msra.mxu0 0.0
    %243 = vmatprep.subr.mxu0 0.0
    %244 = vmatpush1.msra.mxu0 0.0
    %245 = vmatprep.subr.mxu0 0.0
    %246 = vmatpush1.msra.mxu0 0.0
    %247 = vmatprep.subr.mxu0 0.0
    %248 = vmatpush1.msra.mxu0 0.0
    %249 = vmatprep.subr.mxu0 0.0
    %250 = vmatpush1.msra.mxu0 0.0
    %251 = vmatprep.subr.mxu0 0.0
    %252 = vmatpush1.msra.mxu0 0.0
    %253 = vmatprep.subr.mxu0 0.0
    %254 = vmatpush1.msra.mxu0 0.0
    %255 = vmatprep.subr.mxu0 0.0
    %256 = vmatpush1.msra.mxu0 0.0
    %257 = vmatprep.subr.mxu0 0.0
    %258 = vmatpush1.msra.mxu0 0.0
    %259 = vmatprep.subr.mxu0 0.0
    %260 = vmatpush1.msra.mxu0 0.0
    %261 = vmatprep.mubr.f32.mxu0 0.0
    %262 = vmatmul.mubr.f32.gmra.mrb[0].mxu0 %v195
    %v263 = vpop.f32.mrb[0].mxu0
    %v264 = vadd.f32 %v192, %v263
    %v265 = vpop.f32.mrb[0].mxu0
    %266 = vdwg.mxu0
    %v267 = vadd.f32 %v135, %v264
    %v268 = vxor.u32 %v267, 2147483648
    %v269 = vmul.f32 %v268, 1.442695
    %v270 = vpow.pop %v269
    %v271 = vadd.f32 %v270, 1.0
    %v272 = vrcp.pop %v271
    %v273 = vmul.f32 1.0, %v272
    %275 = vrot.lane.b32.xlu0 %v264, 96
    %v276 = vpop.permute.xlu0 %275
    %v278 = vmul.f32 %v273, %v276
    %280 = vrot.lane.b32.xlu0 %v278, 32
    %v281 = vpop.permute.xlu0 %280
    %v283 = vadd.f32 %v135, %v281
    %v284 = vtanh.pop %v283
    %v285 = vsub.f32 1.0, %v273
    %287 = vrot.lane.b32.xlu0 %v284, 112
    %v288 = vpop.permute.xlu0 %287
    %v290 = vmul.f32 %v285, %v288
    %v291 = vmul.f32 %v273, 0.0
    %v292 = vadd.f32 %v290, %v291
    %v293 = vsel %vm180, 1, 0
    %294 = vset.pattern.permute.xlu0 0
    %295 = vperm.xlu0 %294, %v293
    %v296 = vpop.permute.xlu0 %295
    %vm297 = vcmp.eq.s32.totalorder %v296, 1
    %v298 = vsel %vm297, %v292, 0.0
    %v299 = vadd.f32 %v170, %v264
    %v300 = vxor.u32 %v299, 2147483648
    %v301 = vmul.f32 %v300, 1.442695
    %v302 = vpow.pop %v301
    %v303 = vadd.f32 %v302, 1.0
    %v304 = vrcp.pop %v303
    %v305 = vmul.f32 1.0, %v304
    %v306 = vmul.f32 %v305, %v276
    %308 = vrot.lane.b32.xlu0 %v306, 32
    %v309 = vpop.permute.xlu0 %308
    %v311 = vadd.f32 %v170, %v309
    %v312 = vtanh.pop %v311
    %v313 = vsub.f32 1.0, %v305
    %315 = vrot.lane.b32.xlu0 %v312, 112
    %v316 = vpop.permute.xlu0 %315
    %v318 = vmul.f32 %v313, %v316
    %v319 = vmul.f32 %v305, 0.0
    %v320 = vadd.f32 %v318, %v319
    %v321 = vsel %vm187, 1, 0
    %322 = vset.pattern.permute.xlu0 0
    %323 = vperm.xlu0 %322, %v321
    %v324 = vpop.permute.xlu0 %323
    %vm325 = vcmp.eq.s32.totalorder %v324, 1
    %v326 = vsel %vm325, %v320, 0.0
    %328 = vrot.lane.b32.xlu0 %v298, 112
    %v329 = vpop.permute.xlu0 %328
    %332 = vrot.lane.b32.xlu0 %v326, 80
    %v333 = vpop.permute.xlu0 %332
    %vm335 = vcmask 130048
    %v336 = vsel %vm335, %v329, %v333
    %v338 = vsel %vm43, %v336, 0
    %340 = vmatprep.subr.mxu0 0.0
    %341 = vmatpush1.msra.mxu0 %v173
    %342 = vmatprep.subr.mxu0 0.0
    %343 = vmatpush1.msra.mxu0 %v174
    %344 = vmatprep.subr.mxu0 0.0
    %345 = vmatpush1.msra.mxu0 %v175
    %346 = vmatprep.subr.mxu0 0.0
    %347 = vmatpush1.msra.mxu0 %v176
    %348 = vmatprep.subr.mxu0 0.0
    %349 = vmatpush1.msra.mxu0 0.0
    %350 = vmatprep.subr.mxu0 0.0
    %351 = vmatpush1.msra.mxu0 0.0
    %352 = vmatprep.subr.mxu0 0.0
    %353 = vmatpush1.msra.mxu0 0.0
    %354 = vmatprep.subr.mxu0 0.0
    %355 = vmatpush1.msra.mxu0 0.0
    %356 = vmatprep.subr.mxu0 0.0
    %357 = vmatpush1.msra.mxu0 0.0
    %358 = vmatprep.subr.mxu0 0.0
    %359 = vmatpush1.msra.mxu0 0.0
    %360 = vmatprep.subr.mxu0 0.0
    %361 = vmatpush1.msra.mxu0 0.0
    %362 = vmatprep.subr.mxu0 0.0
    %363 = vmatpush1.msra.mxu0 0.0
    %364 = vmatprep.subr.mxu0 0.0
    %365 = vmatpush1.msra.mxu0 0.0
    %366 = vmatprep.subr.mxu0 0.0
    %367 = vmatpush1.msra.mxu0 0.0
    %368 = vmatprep.subr.mxu0 0.0
    %369 = vmatpush1.msra.mxu0 0.0
    %370 = vmatprep.subr.mxu0 0.0
    %371 = vmatpush1.msra.mxu0 0.0
    %372 = vmatprep.subr.mxu0 0.0
    %373 = vmatpush1.msra.mxu0 0.0
    %374 = vmatprep.subr.mxu0 0.0
    %375 = vmatpush1.msra.mxu0 0.0
    %376 = vmatprep.subr.mxu0 0.0
    %377 = vmatpush1.msra.mxu0 0.0
    %378 = vmatprep.subr.mxu0 0.0
    %379 = vmatpush1.msra.mxu0 0.0
    %380 = vmatprep.subr.mxu0 0.0
    %381 = vmatpush1.msra.mxu0 0.0
    %382 = vmatprep.subr.mxu0 0.0
    %383 = vmatpush1.msra.mxu0 0.0
    %384 = vmatprep.subr.mxu0 0.0
    %385 = vmatpush1.msra.mxu0 0.0
    %386 = vmatprep.subr.mxu0 0.0
    %387 = vmatpush1.msra.mxu0 0.0
    %388 = vmatprep.subr.mxu0 0.0
    %389 = vmatpush1.msra.mxu0 0.0
    %390 = vmatprep.subr.mxu0 0.0
    %391 = vmatpush1.msra.mxu0 0.0
    %392 = vmatprep.subr.mxu0 0.0
    %393 = vmatpush1.msra.mxu0 0.0
    %394 = vmatprep.subr.mxu0 0.0
    %395 = vmatpush1.msra.mxu0 0.0
    %396 = vmatprep.subr.mxu0 0.0
    %397 = vmatpush1.msra.mxu0 0.0
    %398 = vmatprep.subr.mxu0 0.0
    %399 = vmatpush1.msra.mxu0 0.0
    %400 = vmatprep.subr.mxu0 0.0
    %401 = vmatpush1.msra.mxu0 0.0
    %402 = vmatprep.subr.mxu0 0.0
    %403 = vmatpush1.msra.mxu0 0.0
    %404 = vmatprep.mubr.f32.mxu0 0.0
    %405 = vmatmul.mubr.f32.gmra.mrb[0].mxu0 %v338
    %v406 = vpop.f32.mrb[0].mxu0
    %v407 = vadd.f32 %v192, %v406
    %v408 = vpop.f32.mrb[0].mxu0
    %409 = vdwg.mxu0
    %v410 = vadd.f32 %v140, %v407
    %v411 = vxor.u32 %v410, 2147483648
    %v412 = vmul.f32 %v411, 1.442695
    %v413 = vpow.pop %v412
    %v414 = vadd.f32 %v413, 1.0
    %v415 = vrcp.pop %v414
    %v416 = vmul.f32 1.0, %v415
    %418 = vrot.lane.b32.xlu0 %v407, 96
    %v419 = vpop.permute.xlu0 %418
    %v421 = vmul.f32 %v416, %v419
    %423 = vrot.lane.b32.xlu0 %v421, 32
    %v424 = vpop.permute.xlu0 %423
    %v426 = vadd.f32 %v140, %v424
    %v427 = vtanh.pop %v426
    %v428 = vsub.f32 1.0, %v416
    %430 = vrot.lane.b32.xlu0 %v427, 112
    %v431 = vpop.permute.xlu0 %430
    %v433 = vmul.f32 %v428, %v431
    %v434 = vmul.f32 %v416, %v298
    %v435 = vadd.f32 %v433, %v434
    %v436 = vsel %vm181, 1, 0
    %437 = vset.pattern.permute.xlu0 0
    %438 = vperm.xlu0 %437, %v436
    %v439 = vpop.permute.xlu0 %438
    %vm440 = vcmp.eq.s32.totalorder %v439, 1
    %v441 = vsel %vm440, %v435, %v298
    %v442 = vsel %vm440, %v435, 0.0
    %v443 = vadd.f32 %v165, %v407
    %v444 = vxor.u32 %v443, 2147483648
    %v445 = vmul.f32 %v444, 1.442695
    %v446 = vpow.pop %v445
    %v447 = vadd.f32 %v446, 1.0
    %v448 = vrcp.pop %v447
    %v449 = vmul.f32 1.0, %v448
    %v450 = vmul.f32 %v449, %v419
    %452 = vrot.lane.b32.xlu0 %v450, 32
    %v453 = vpop.permute.xlu0 %452
    %v455 = vadd.f32 %v165, %v453
    %v456 = vtanh.pop %v455
    %v457 = vsub.f32 1.0, %v449
    %459 = vrot.lane.b32.xlu0 %v456, 112
    %v460 = vpop.permute.xlu0 %459
    %v462 = vmul.f32 %v457, %v460
    %v463 = vmul.f32 %v449, %v326
    %v464 = vadd.f32 %v462, %v463
    %v465 = vsel %vm186, 1, 0
    %466 = vset.pattern.permute.xlu0 0
    %467 = vperm.xlu0 %466, %v465
    %v468 = vpop.permute.xlu0 %467
    %vm469 = vcmp.eq.s32.totalorder %v468, 1
    %v470 = vsel %vm469, %v464, %v326
    %v471 = vsel %vm469, %v464, 0.0
    %473 = vrot.lane.b32.xlu0 %v441, 112
    %v474 = vpop.permute.xlu0 %473
    %477 = vrot.lane.b32.xlu0 %v470, 80
    %v478 = vpop.permute.xlu0 %477
    %v480 = vsel %vm335, %v474, %v478
    %v482 = vsel %vm43, %v480, 0
    %484 = vmatprep.subr.mxu0 0.0
    %485 = vmatpush1.msra.mxu0 %v173
    %486 = vmatprep.subr.mxu0 0.0
    %487 = vmatpush1.msra.mxu0 %v174
    %488 = vmatprep.subr.mxu0 0.0
    %489 = vmatpush1.msra.mxu0 %v175
    %490 = vmatprep.subr.mxu0 0.0
    %491 = vmatpush1.msra.mxu0 %v176
    %492 = vmatprep.subr.mxu0 0.0
    %493 = vmatpush1.msra.mxu0 0.0
    %494 = vmatprep.subr.mxu0 0.0
    %495 = vmatpush1.msra.mxu0 0.0
    %496 = vmatprep.subr.mxu0 0.0
    %497 = vmatpush1.msra.mxu0 0.0
    %498 = vmatprep.subr.mxu0 0.0
    %499 = vmatpush1.msra.mxu0 0.0
    %500 = vmatprep.subr.mxu0 0.0
    %501 = vmatpush1.msra.mxu0 0.0
    %502 = vmatprep.subr.mxu0 0.0
    %503 = vmatpush1.msra.mxu0 0.0
    %504 = vmatprep.subr.mxu0 0.0
    %505 = vmatpush1.msra.mxu0 0.0
    %506 = vmatprep.subr.mxu0 0.0
    %507 = vmatpush1.msra.mxu0 0.0
    %508 = vmatprep.subr.mxu0 0.0
    %509 = vmatpush1.msra.mxu0 0.0
    %510 = vmatprep.subr.mxu0 0.0
    %511 = vmatpush1.msra.mxu0 0.0
    %512 = vmatprep.subr.mxu0 0.0
    %513 = vmatpush1.msra.mxu0 0.0
    %514 = vmatprep.subr.mxu0 0.0
    %515 = vmatpush1.msra.mxu0 0.0
    %516 = vmatprep.subr.mxu0 0.0
    %517 = vmatpush1.msra.mxu0 0.0
    %518 = vmatprep.subr.mxu0 0.0
    %519 = vmatpush1.msra.mxu0 0.0
    %520 = vmatprep.subr.mxu0 0.0
    %521 = vmatpush1.msra.mxu0 0.0
    %522 = vmatprep.subr.mxu0 0.0
    %523 = vmatpush1.msra.mxu0 0.0
    %524 = vmatprep.subr.mxu0 0.0
    %525 = vmatpush1.msra.mxu0 0.0
    %526 = vmatprep.subr.mxu0 0.0
    %527 = vmatpush1.msra.mxu0 0.0
    %528 = vmatprep.subr.mxu0 0.0
    %529 = vmatpush1.msra.mxu0 0.0
    %530 = vmatprep.subr.mxu0 0.0
    %531 = vmatpush1.msra.mxu0 0.0
    %532 = vmatprep.subr.mxu0 0.0
    %533 = vmatpush1.msra.mxu0 0.0
    %534 = vmatprep.subr.mxu0 0.0
    %535 = vmatpush1.msra.mxu0 0.0
    %536 = vmatprep.subr.mxu0 0.0
    %537 = vmatpush1.msra.mxu0 0.0
    %538 = vmatprep.subr.mxu0 0.0
    %539 = vmatpush1.msra.mxu0 0.0
    %540 = vmatprep.subr.mxu0 0.0
    %541 = vmatpush1.msra.mxu0 0.0
    %542 = vmatprep.subr.mxu0 0.0
    %543 = vmatpush1.msra.mxu0 0.0
    %544 = vmatprep.subr.mxu0 0.0
    %545 = vmatpush1.msra.mxu0 0.0
    %546 = vmatprep.subr.mxu0 0.0
    %547 = vmatpush1.msra.mxu0 0.0
    %548 = vmatprep.mubr.f32.mxu0 0.0
    %549 = vmatmul.mubr.f32.gmra.mrb[0].mxu0 %v482
    %v550 = vpop.f32.mrb[0].mxu0
    %v551 = vadd.f32 %v192, %v550
    %v552 = vpop.f32.mrb[0].mxu0
    %553 = vdwg.mxu0
    %v554 = vadd.f32 %v145, %v551
    %v555 = vxor.u32 %v554, 2147483648
    %v556 = vmul.f32 %v555, 1.442695
    %v557 = vpow.pop %v556
    %v558 = vadd.f32 %v557, 1.0
    %v559 = vrcp.pop %v558
    %v560 = vmul.f32 1.0, %v559
    %562 = vrot.lane.b32.xlu0 %v551, 96
    %v563 = vpop.permute.xlu0 %562
    %v565 = vmul.f32 %v560, %v563
    %567 = vrot.lane.b32.xlu0 %v565, 32
    %v568 = vpop.permute.xlu0 %567
    %v570 = vadd.f32 %v145, %v568
    %v571 = vtanh.pop %v570
    %v572 = vsub.f32 1.0, %v560
    %574 = vrot.lane.b32.xlu0 %v571, 112
    %v575 = vpop.permute.xlu0 %574
    %v577 = vmul.f32 %v572, %v575
    %v578 = vmul.f32 %v560, %v441
    %v579 = vadd.f32 %v577, %v578
    %v580 = vsel %vm182, 1, 0
    %581 = vset.pattern.permute.xlu0 0
    %582 = vperm.xlu0 %581, %v580
    %v583 = vpop.permute.xlu0 %582
    %vm584 = vcmp.eq.s32.totalorder %v583, 1
    %v585 = vsel %vm584, %v579, %v441
    %v586 = vsel %vm584, %v579, 0.0
    %v587 = vadd.f32 %v160, %v551
    %v588 = vxor.u32 %v587, 2147483648
    %v589 = vmul.f32 %v588, 1.442695
    %v590 = vpow.pop %v589
    %v591 = vadd.f32 %v590, 1.0
    %v592 = vrcp.pop %v591
    %v593 = vmul.f32 1.0, %v592
    %v594 = vmul.f32 %v593, %v563
    %596 = vrot.lane.b32.xlu0 %v594, 32
    %v597 = vpop.permute.xlu0 %596
    %v599 = vadd.f32 %v160, %v597
    %v600 = vtanh.pop %v599
    %v601 = vsub.f32 1.0, %v593
    %603 = vrot.lane.b32.xlu0 %v600, 112
    %v604 = vpop.permute.xlu0 %603
    %v606 = vmul.f32 %v601, %v604
    %v607 = vmul.f32 %v593, %v470
    %v608 = vadd.f32 %v606, %v607
    %v609 = vsel %vm185, 1, 0
    %610 = vset.pattern.permute.xlu0 0
    %611 = vperm.xlu0 %610, %v609
    %v612 = vpop.permute.xlu0 %611
    %vm613 = vcmp.eq.s32.totalorder %v612, 1
    %v614 = vsel %vm613, %v608, %v470
    %v615 = vsel %vm613, %v608, 0.0
    %617 = vrot.lane.b32.xlu0 %v585, 112
    %v618 = vpop.permute.xlu0 %617
    %621 = vrot.lane.b32.xlu0 %v614, 80
    %v622 = vpop.permute.xlu0 %621
    %v624 = vsel %vm335, %v618, %v622
    %v626 = vsel %vm43, %v624, 0
    %628 = vmatprep.subr.mxu0 0.0
    %629 = vmatpush1.msra.mxu0 %v173
    %630 = vmatprep.subr.mxu0 0.0
    %631 = vmatpush1.msra.mxu0 %v174
    %632 = vmatprep.subr.mxu0 0.0
    %633 = vmatpush1.msra.mxu0 %v175
    %634 = vmatprep.subr.mxu0 0.0
    %635 = vmatpush1.msra.mxu0 %v176
    %636 = vmatprep.subr.mxu0 0.0
    %637 = vmatpush1.msra.mxu0 0.0
    %638 = vmatprep.subr.mxu0 0.0
    %639 = vmatpush1.msra.mxu0 0.0
    %640 = vmatprep.subr.mxu0 0.0
    %641 = vmatpush1.msra.mxu0 0.0
    %642 = vmatprep.subr.mxu0 0.0
    %643 = vmatpush1.msra.mxu0 0.0
    %644 = vmatprep.subr.mxu0 0.0
    %645 = vmatpush1.msra.mxu0 0.0
    %646 = vmatprep.subr.mxu0 0.0
    %647 = vmatpush1.msra.mxu0 0.0
    %648 = vmatprep.subr.mxu0 0.0
    %649 = vmatpush1.msra.mxu0 0.0
    %650 = vmatprep.subr.mxu0 0.0
    %651 = vmatpush1.msra.mxu0 0.0
    %652 = vmatprep.subr.mxu0 0.0
    %653 = vmatpush1.msra.mxu0 0.0
    %654 = vmatprep.subr.mxu0 0.0
    %655 = vmatpush1.msra.mxu0 0.0
    %656 = vmatprep.subr.mxu0 0.0
    %657 = vmatpush1.msra.mxu0 0.0
    %658 = vmatprep.subr.mxu0 0.0
    %659 = vmatpush1.msra.mxu0 0.0
    %660 = vmatprep.subr.mxu0 0.0
    %661 = vmatpush1.msra.mxu0 0.0
    %662 = vmatprep.subr.mxu0 0.0
    %663 = vmatpush1.msra.mxu0 0.0
    %664 = vmatprep.subr.mxu0 0.0
    %665 = vmatpush1.msra.mxu0 0.0
    %666 = vmatprep.subr.mxu0 0.0
    %667 = vmatpush1.msra.mxu0 0.0
    %668 = vmatprep.subr.mxu0 0.0
    %669 = vmatpush1.msra.mxu0 0.0
    %670 = vmatprep.subr.mxu0 0.0
    %671 = vmatpush1.msra.mxu0 0.0
    %672 = vmatprep.subr.mxu0 0.0
    %673 = vmatpush1.msra.mxu0 0.0
    %674 = vmatprep.subr.mxu0 0.0
    %675 = vmatpush1.msra.mxu0 0.0
    %676 = vmatprep.subr.mxu0 0.0
    %677 = vmatpush1.msra.mxu0 0.0
    %678 = vmatprep.subr.mxu0 0.0
    %679 = vmatpush1.msra.mxu0 0.0
    %680 = vmatprep.subr.mxu0 0.0
    %681 = vmatpush1.msra.mxu0 0.0
    %682 = vmatprep.subr.mxu0 0.0
    %683 = vmatpush1.msra.mxu0 0.0
    %684 = vmatprep.subr.mxu0 0.0
    %685 = vmatpush1.msra.mxu0 0.0
    %686 = vmatprep.subr.mxu0 0.0
    %687 = vmatpush1.msra.mxu0 0.0
    %688 = vmatprep.subr.mxu0 0.0
    %689 = vmatpush1.msra.mxu0 0.0
    %690 = vmatprep.subr.mxu0 0.0
    %691 = vmatpush1.msra.mxu0 0.0
    %692 = vmatprep.mubr.f32.mxu0 0.0
    %693 = vmatmul.mubr.f32.gmra.mrb[0].mxu0 %v626
    %v694 = vpop.f32.mrb[0].mxu0
    %v695 = vadd.f32 %v192, %v694
    %v696 = vpop.f32.mrb[0].mxu0
    %697 = vdwg.mxu0
    %v698 = vadd.f32 %v150, %v695
    %v699 = vxor.u32 %v698, 2147483648
    %v700 = vmul.f32 %v699, 1.442695
    %v701 = vpow.pop %v700
    %v702 = vadd.f32 %v701, 1.0
    %v703 = vrcp.pop %v702
    %v704 = vmul.f32 1.0, %v703
    %706 = vrot.lane.b32.xlu0 %v695, 96
    %v707 = vpop.permute.xlu0 %706
    %v709 = vmul.f32 %v704, %v707
    %711 = vrot.lane.b32.xlu0 %v709, 32
    %v712 = vpop.permute.xlu0 %711
    %v714 = vadd.f32 %v150, %v712
    %v715 = vtanh.pop %v714
    %v716 = vsub.f32 1.0, %v704
    %718 = vrot.lane.b32.xlu0 %v715, 112
    %v719 = vpop.permute.xlu0 %718
    %v721 = vmul.f32 %v716, %v719
    %v722 = vmul.f32 %v704, %v585
    %v723 = vadd.f32 %v721, %v722
    %v724 = vsel %vm183, 1, 0
    %725 = vset.pattern.permute.xlu0 0
    %726 = vperm.xlu0 %725, %v724
    %v727 = vpop.permute.xlu0 %726
    %vm728 = vcmp.eq.s32.totalorder %v727, 1
    %v729 = vsel %vm728, %v723, %v585
    %v730 = vsel %vm728, %v723, 0.0
    %v731 = vadd.f32 %v155, %v695
    %v732 = vxor.u32 %v731, 2147483648
    %v733 = vmul.f32 %v732, 1.442695
    %v734 = vpow.pop %v733
    %v735 = vadd.f32 %v734, 1.0
    %v736 = vrcp.pop %v735
    %v737 = vmul.f32 1.0, %v736
    %v738 = vmul.f32 %v737, %v707
    %740 = vrot.lane.b32.xlu0 %v738, 32
    %v741 = vpop.permute.xlu0 %740
    %v743 = vadd.f32 %v155, %v741
    %v744 = vtanh.pop %v743
    %v745 = vsub.f32 1.0, %v737
    %747 = vrot.lane.b32.xlu0 %v744, 112
    %v748 = vpop.permute.xlu0 %747
    %v750 = vmul.f32 %v745, %v748
    %v751 = vmul.f32 %v737, %v614
    %v752 = vadd.f32 %v750, %v751
    %v753 = vsel %vm184, 1, 0
    %754 = vset.pattern.permute.xlu0 0
    %755 = vperm.xlu0 %754, %v753
    %v756 = vpop.permute.xlu0 %755
    %vm757 = vcmp.eq.s32.totalorder %v756, 1
    %v758 = vsel %vm757, %v752, %v614
    %v759 = vsel %vm757, %v752, 0.0
    %761 = vrot.lane.b32.xlu0 %v729, 112
    %v762 = vpop.permute.xlu0 %761
    %765 = vrot.lane.b32.xlu0 %v758, 80
    %v766 = vpop.permute.xlu0 %765
    %v768 = vsel %vm335, %v762, %v766
    %v770 = vsel %vm43, %v768, 0
    %772 = vmatprep.subr.mxu0 0.0
    %773 = vmatpush1.msra.mxu0 %v173
    %774 = vmatprep.subr.mxu0 0.0
    %775 = vmatpush1.msra.mxu0 %v174
    %776 = vmatprep.subr.mxu0 0.0
    %777 = vmatpush1.msra.mxu0 %v175
    %778 = vmatprep.subr.mxu0 0.0
    %779 = vmatpush1.msra.mxu0 %v176
    %780 = vmatprep.subr.mxu0 0.0
    %781 = vmatpush1.msra.mxu0 0.0
    %782 = vmatprep.subr.mxu0 0.0
    %783 = vmatpush1.msra.mxu0 0.0
    %784 = vmatprep.subr.mxu0 0.0
    %785 = vmatpush1.msra.mxu0 0.0
    %786 = vmatprep.subr.mxu0 0.0
    %787 = vmatpush1.msra.mxu0 0.0
    %788 = vmatprep.subr.mxu0 0.0
    %789 = vmatpush1.msra.mxu0 0.0
    %790 = vmatprep.subr.mxu0 0.0
    %791 = vmatpush1.msra.mxu0 0.0
    %792 = vmatprep.subr.mxu0 0.0
    %793 = vmatpush1.msra.mxu0 0.0
    %794 = vmatprep.subr.mxu0 0.0
    %795 = vmatpush1.msra.mxu0 0.0
    %796 = vmatprep.subr.mxu0 0.0
    %797 = vmatpush1.msra.mxu0 0.0
    %798 = vmatprep.subr.mxu0 0.0
    %799 = vmatpush1.msra.mxu0 0.0
    %800 = vmatprep.subr.mxu0 0.0
    %801 = vmatpush1.msra.mxu0 0.0
    %802 = vmatprep.subr.mxu0 0.0
    %803 = vmatpush1.msra.mxu0 0.0
    %804 = vmatprep.subr.mxu0 0.0
    %805 = vmatpush1.msra.mxu0 0.0
    %806 = vmatprep.subr.mxu0 0.0
    %807 = vmatpush1.msra.mxu0 0.0
    %808 = vmatprep.subr.mxu0 0.0
    %809 = vmatpush1.msra.mxu0 0.0
    %810 = vmatprep.subr.mxu0 0.0
    %811 = vmatpush1.msra.mxu0 0.0
    %812 = vmatprep.subr.mxu0 0.0
    %813 = vmatpush1.msra.mxu0 0.0
    %814 = vmatprep.subr.mxu0 0.0
    %815 = vmatpush1.msra.mxu0 0.0
    %816 = vmatprep.subr.mxu0 0.0
    %817 = vmatpush1.msra.mxu0 0.0
    %818 = vmatprep.subr.mxu0 0.0
    %819 = vmatpush1.msra.mxu0 0.0
    %820 = vmatprep.subr.mxu0 0.0
    %821 = vmatpush1.msra.mxu0 0.0
    %822 = vmatprep.subr.mxu0 0.0
    %823 = vmatpush1.msra.mxu0 0.0
    %824 = vmatprep.subr.mxu0 0.0
    %825 = vmatpush1.msra.mxu0 0.0
    %826 = vmatprep.subr.mxu0 0.0
    %827 = vmatpush1.msra.mxu0 0.0
    %828 = vmatprep.subr.mxu0 0.0
    %829 = vmatpush1.msra.mxu0 0.0
    %830 = vmatprep.subr.mxu0 0.0
    %831 = vmatpush1.msra.mxu0 0.0
    %832 = vmatprep.subr.mxu0 0.0
    %833 = vmatpush1.msra.mxu0 0.0
    %834 = vmatprep.subr.mxu0 0.0
    %835 = vmatpush1.msra.mxu0 0.0
    %836 = vmatprep.mubr.f32.mxu0 0.0
    %837 = vmatmul.mubr.f32.gmra.mrb[0].mxu0 %v770
    %v838 = vpop.f32.mrb[0].mxu0
    %v839 = vadd.f32 %v192, %v838
    %v840 = vpop.f32.mrb[0].mxu0
    %841 = vdwg.mxu0
    %v842 = vadd.f32 %v155, %v839
    %v843 = vxor.u32 %v842, 2147483648
    %v844 = vmul.f32 %v843, 1.442695
    %v845 = vpow.pop %v844
    %v846 = vadd.f32 %v845, 1.0
    %v847 = vrcp.pop %v846
    %v848 = vmul.f32 1.0, %v847
    %850 = vrot.lane.b32.xlu0 %v839, 96
    %v851 = vpop.permute.xlu0 %850
    %v853 = vmul.f32 %v848, %v851
    %855 = vrot.lane.b32.xlu0 %v853, 32
    %v856 = vpop.permute.xlu0 %855
    %v858 = vadd.f32 %v155, %v856
    %v859 = vtanh.pop %v858
    %v860 = vsub.f32 1.0, %v848
    %862 = vrot.lane.b32.xlu0 %v859, 112
    %v863 = vpop.permute.xlu0 %862
    %v865 = vmul.f32 %v860, %v863
    %v866 = vmul.f32 %v848, %v729
    %v867 = vadd.f32 %v865, %v866
    %v868 = vsel %vm757, %v867, %v729
    %v869 = vsel %vm757, %v867, 0.0
    %v870 = vadd.f32 %v150, %v839
    %v871 = vxor.u32 %v870, 2147483648
    %v872 = vmul.f32 %v871, 1.442695
    %v873 = vpow.pop %v872
    %v874 = vadd.f32 %v873, 1.0
    %v875 = vrcp.pop %v874
    %v876 = vmul.f32 1.0, %v875
    %v877 = vmul.f32 %v876, %v851
    %879 = vrot.lane.b32.xlu0 %v877, 32
    %v880 = vpop.permute.xlu0 %879
    %v882 = vadd.f32 %v150, %v880
    %v883 = vtanh.pop %v882
    %v884 = vsub.f32 1.0, %v876
    %886 = vrot.lane.b32.xlu0 %v883, 112
    %v887 = vpop.permute.xlu0 %886
    %v889 = vmul.f32 %v884, %v887
    %v890 = vmul.f32 %v876, %v758
    %v891 = vadd.f32 %v889, %v890
    %v892 = vsel %vm728, %v891, %v758
    %v893 = vsel %vm728, %v891, 0.0
    %895 = vrot.lane.b32.xlu0 %v868, 112
    %v896 = vpop.permute.xlu0 %895
    %899 = vrot.lane.b32.xlu0 %v892, 80
    %v900 = vpop.permute.xlu0 %899
    %v902 = vsel %vm335, %v896, %v900
    %v904 = vsel %vm43, %v902, 0
    %906 = vmatprep.subr.mxu0 0.0
    %907 = vmatpush1.msra.mxu0 %v173
    %908 = vmatprep.subr.mxu0 0.0
    %909 = vmatpush1.msra.mxu0 %v174
    %910 = vmatprep.subr.mxu0 0.0
    %911 = vmatpush1.msra.mxu0 %v175
    %912 = vmatprep.subr.mxu0 0.0
    %913 = vmatpush1.msra.mxu0 %v176
    %914 = vmatprep.subr.mxu0 0.0
    %915 = vmatpush1.msra.mxu0 0.0
    %916 = vmatprep.subr.mxu0 0.0
    %917 = vmatpush1.msra.mxu0 0.0
    %918 = vmatprep.subr.mxu0 0.0
    %919 = vmatpush1.msra.mxu0 0.0
    %920 = vmatprep.subr.mxu0 0.0
    %921 = vmatpush1.msra.mxu0 0.0
    %922 = vmatprep.subr.mxu0 0.0
    %923 = vmatpush1.msra.mxu0 0.0
    %924 = vmatprep.subr.mxu0 0.0
    %925 = vmatpush1.msra.mxu0 0.0
    %926 = vmatprep.subr.mxu0 0.0
    %927 = vmatpush1.msra.mxu0 0.0
    %928 = vmatprep.subr.mxu0 0.0
    %929 = vmatpush1.msra.mxu0 0.0
    %930 = vmatprep.subr.mxu0 0.0
    %931 = vmatpush1.msra.mxu0 0.0
    %932 = vmatprep.subr.mxu0 0.0
    %933 = vmatpush1.msra.mxu0 0.0
    %934 = vmatprep.subr.mxu0 0.0
    %935 = vmatpush1.msra.mxu0 0.0
    %936 = vmatprep.subr.mxu0 0.0
    %937 = vmatpush1.msra.mxu0 0.0
    %938 = vmatprep.subr.mxu0 0.0
    %939 = vmatpush1.msra.mxu0 0.0
    %940 = vmatprep.subr.mxu0 0.0
    %941 = vmatpush1.msra.mxu0 0.0
    %942 = vmatprep.subr.mxu0 0.0
    %943 = vmatpush1.msra.mxu0 0.0
    %944 = vmatprep.subr.mxu0 0.0
    %945 = vmatpush1.msra.mxu0 0.0
    %946 = vmatprep.subr.mxu0 0.0
    %947 = vmatpush1.msra.mxu0 0.0
    %948 = vmatprep.subr.mxu0 0.0
    %949 = vmatpush1.msra.mxu0 0.0
    %950 = vmatprep.subr.mxu0 0.0
    %951 = vmatpush1.msra.mxu0 0.0
    %952 = vmatprep.subr.mxu0 0.0
    %953 = vmatpush1.msra.mxu0 0.0
    %954 = vmatprep.subr.mxu0 0.0
    %955 = vmatpush1.msra.mxu0 0.0
    %956 = vmatprep.subr.mxu0 0.0
    %957 = vmatpush1.msra.mxu0 0.0
    %958 = vmatprep.subr.mxu0 0.0
    %959 = vmatpush1.msra.mxu0 0.0
    %960 = vmatprep.subr.mxu0 0.0
    %961 = vmatpush1.msra.mxu0 0.0
    %962 = vmatprep.subr.mxu0 0.0
    %963 = vmatpush1.msra.mxu0 0.0
    %964 = vmatprep.subr.mxu0 0.0
    %965 = vmatpush1.msra.mxu0 0.0
    %966 = vmatprep.subr.mxu0 0.0
    %967 = vmatpush1.msra.mxu0 0.0
    %968 = vmatprep.subr.mxu0 0.0
    %969 = vmatpush1.msra.mxu0 0.0
    %970 = vmatprep.mubr.f32.mxu0 0.0
    %971 = vmatmul.mubr.f32.gmra.mrb[0].mxu0 %v904
    %v972 = vpop.f32.mrb[0].mxu0
    %v973 = vadd.f32 %v192, %v972
    %v974 = vpop.f32.mrb[0].mxu0
    %975 = vdwg.mxu0
    %v976 = vadd.f32 %v160, %v973
    %v977 = vxor.u32 %v976, 2147483648
    %v978 = vmul.f32 %v977, 1.442695
    %v979 = vpow.pop %v978
    %v980 = vadd.f32 %v979, 1.0
    %v981 = vrcp.pop %v980
    %v982 = vmul.f32 1.0, %v981
    %984 = vrot.lane.b32.xlu0 %v973, 96
    %v985 = vpop.permute.xlu0 %984
    %v987 = vmul.f32 %v982, %v985
    %989 = vrot.lane.b32.xlu0 %v987, 32
    %v990 = vpop.permute.xlu0 %989
    %v992 = vadd.f32 %v160, %v990
    %v993 = vtanh.pop %v992
    %v994 = vsub.f32 1.0, %v982
    %996 = vrot.lane.b32.xlu0 %v993, 112
    %v997 = vpop.permute.xlu0 %996
    %v999 = vmul.f32 %v994, %v997
    %v1000 = vmul.f32 %v982, %v868
    %v1001 = vadd.f32 %v999, %v1000
    %v1002 = vsel %vm613, %v1001, %v868
    %v1003 = vsel %vm613, %v1001, 0.0
    %v1004 = vadd.f32 %v145, %v973
    %v1005 = vxor.u32 %v1004, 2147483648
    %v1006 = vmul.f32 %v1005, 1.442695
    %v1007 = vpow.pop %v1006
    %v1008 = vadd.f32 %v1007, 1.0
    %v1009 = vrcp.pop %v1008
    %v1010 = vmul.f32 1.0, %v1009
    %v1011 = vmul.f32 %v1010, %v985
    %1013 = vrot.lane.b32.xlu0 %v1011, 32
    %v1014 = vpop.permute.xlu0 %1013
    %v1016 = vadd.f32 %v145, %v1014
    %v1017 = vtanh.pop %v1016
    %v1018 = vsub.f32 1.0, %v1010
    %1020 = vrot.lane.b32.xlu0 %v1017, 112
    %v1021 = vpop.permute.xlu0 %1020
    %v1023 = vmul.f32 %v1018, %v1021
    %v1024 = vmul.f32 %v1010, %v892
    %v1025 = vadd.f32 %v1023, %v1024
    %v1026 = vsel %vm584, %v1025, %v892
    %v1027 = vsel %vm584, %v1025, 0.0
    %1029 = vrot.lane.b32.xlu0 %v1002, 112
    %v1030 = vpop.permute.xlu0 %1029
    %1033 = vrot.lane.b32.xlu0 %v1026, 80
    %v1034 = vpop.permute.xlu0 %1033
    %v1036 = vsel %vm335, %v1030, %v1034
    %v1038 = vsel %vm43, %v1036, 0
    %1040 = vmatprep.subr.mxu0 0.0
    %1041 = vmatpush1.msra.mxu0 %v173
    %1042 = vmatprep.subr.mxu0 0.0
    %1043 = vmatpush1.msra.mxu0 %v174
    %1044 = vmatprep.subr.mxu0 0.0
    %1045 = vmatpush1.msra.mxu0 %v175
    %1046 = vmatprep.subr.mxu0 0.0
    %1047 = vmatpush1.msra.mxu0 %v176
    %1048 = vmatprep.subr.mxu0 0.0
    %1049 = vmatpush1.msra.mxu0 0.0
    %1050 = vmatprep.subr.mxu0 0.0
    %1051 = vmatpush1.msra.mxu0 0.0
    %1052 = vmatprep.subr.mxu0 0.0
    %1053 = vmatpush1.msra.mxu0 0.0
    %1054 = vmatprep.subr.mxu0 0.0
    %1055 = vmatpush1.msra.mxu0 0.0
    %1056 = vmatprep.subr.mxu0 0.0
    %1057 = vmatpush1.msra.mxu0 0.0
    %1058 = vmatprep.subr.mxu0 0.0
    %1059 = vmatpush1.msra.mxu0 0.0
    %1060 = vmatprep.subr.mxu0 0.0
    %1061 = vmatpush1.msra.mxu0 0.0
    %1062 = vmatprep.subr.mxu0 0.0
    %1063 = vmatpush1.msra.mxu0 0.0
    %1064 = vmatprep.subr.mxu0 0.0
    %1065 = vmatpush1.msra.mxu0 0.0
    %1066 = vmatprep.subr.mxu0 0.0
    %1067 = vmatpush1.msra.mxu0 0.0
    %1068 = vmatprep.subr.mxu0 0.0
    %1069 = vmatpush1.msra.mxu0 0.0
    %1070 = vmatprep.subr.mxu0 0.0
    %1071 = vmatpush1.msra.mxu0 0.0
    %1072 = vmatprep.subr.mxu0 0.0
    %1073 = vmatpush1.msra.mxu0 0.0
    %1074 = vmatprep.subr.mxu0 0.0
    %1075 = vmatpush1.msra.mxu0 0.0
    %1076 = vmatprep.subr.mxu0 0.0
    %1077 = vmatpush1.msra.mxu0 0.0
    %1078 = vmatprep.subr.mxu0 0.0
    %1079 = vmatpush1.msra.mxu0 0.0
    %1080 = vmatprep.subr.mxu0 0.0
    %1081 = vmatpush1.msra.mxu0 0.0
    %1082 = vmatprep.subr.mxu0 0.0
    %1083 = vmatpush1.msra.mxu0 0.0
    %1084 = vmatprep.subr.mxu0 0.0
    %1085 = vmatpush1.msra.mxu0 0.0
    %1086 = vmatprep.subr.mxu0 0.0
    %1087 = vmatpush1.msra.mxu0 0.0
    %1088 = vmatprep.subr.mxu0 0.0
    %1089 = vmatpush1.msra.mxu0 0.0
    %1090 = vmatprep.subr.mxu0 0.0
    %1091 = vmatpush1.msra.mxu0 0.0
    %1092 = vmatprep.subr.mxu0 0.0
    %1093 = vmatpush1.msra.mxu0 0.0
    %1094 = vmatprep.subr.mxu0 0.0
    %1095 = vmatpush1.msra.mxu0 0.0
    %1096 = vmatprep.subr.mxu0 0.0
    %1097 = vmatpush1.msra.mxu0 0.0
    %1098 = vmatprep.subr.mxu0 0.0
    %1099 = vmatpush1.msra.mxu0 0.0
    %1100 = vmatprep.subr.mxu0 0.0
    %1101 = vmatpush1.msra.mxu0 0.0
    %1102 = vmatprep.subr.mxu0 0.0
    %1103 = vmatpush1.msra.mxu0 0.0
    %1104 = vmatprep.mubr.f32.mxu0 0.0
    %1105 = vmatmul.mubr.f32.gmra.mrb[0].mxu0 %v1038
    %v1106 = vpop.f32.mrb[0].mxu0
    %v1107 = vadd.f32 %v192, %v1106
    %v1108 = vpop.f32.mrb[0].mxu0
    %1109 = vdwg.mxu0
    %v1110 = vadd.f32 %v165, %v1107
    %v1111 = vxor.u32 %v1110, 2147483648
    %v1112 = vmul.f32 %v1111, 1.442695
    %v1113 = vpow.pop %v1112
    %v1114 = vadd.f32 %v1113, 1.0
    %v1115 = vrcp.pop %v1114
    %v1116 = vmul.f32 1.0, %v1115
    %1118 = vrot.lane.b32.xlu0 %v1107, 96
    %v1119 = vpop.permute.xlu0 %1118
    %v1121 = vmul.f32 %v1116, %v1119
    %1123 = vrot.lane.b32.xlu0 %v1121, 32
    %v1124 = vpop.permute.xlu0 %1123
    %v1126 = vadd.f32 %v165, %v1124
    %v1127 = vtanh.pop %v1126
    %v1128 = vsub.f32 1.0, %v1116
    %1130 = vrot.lane.b32.xlu0 %v1127, 112
    %v1131 = vpop.permute.xlu0 %1130
    %v1133 = vmul.f32 %v1128, %v1131
    %v1134 = vmul.f32 %v1116, %v1002
    %v1135 = vadd.f32 %v1133, %v1134
    %v1136 = vsel %vm469, %v1135, %v1002
    %v1137 = vsel %vm469, %v1135, 0.0
    %v1138 = vadd.f32 %v140, %v1107
    %v1139 = vxor.u32 %v1138, 2147483648
    %v1140 = vmul.f32 %v1139, 1.442695
    %v1141 = vpow.pop %v1140
    %v1142 = vadd.f32 %v1141, 1.0
    %v1143 = vrcp.pop %v1142
    %v1144 = vmul.f32 1.0, %v1143
    %v1145 = vmul.f32 %v1144, %v1119
    %1147 = vrot.lane.b32.xlu0 %v1145, 32
    %v1148 = vpop.permute.xlu0 %1147
    %v1150 = vadd.f32 %v140, %v1148
    %v1151 = vtanh.pop %v1150
    %v1152 = vsub.f32 1.0, %v1144
    %1154 = vrot.lane.b32.xlu0 %v1151, 112
    %v1155 = vpop.permute.xlu0 %1154
    %v1157 = vmul.f32 %v1152, %v1155
    %v1158 = vmul.f32 %v1144, %v1026
    %v1159 = vadd.f32 %v1157, %v1158
    %v1160 = vsel %vm440, %v1159, %v1026
    %v1161 = vsel %vm440, %v1159, 0.0
    %1163 = vrot.lane.b32.xlu0 %v1136, 112
    %v1164 = vpop.permute.xlu0 %1163
    %1167 = vrot.lane.b32.xlu0 %v1160, 80
    %v1168 = vpop.permute.xlu0 %1167
    %v1170 = vsel %vm335, %v1164, %v1168
    %v1172 = vsel %vm43, %v1170, 0
    %1174 = vmatprep.subr.mxu0 0.0
    %1175 = vmatpush1.msra.mxu0 %v173
    %1176 = vmatprep.subr.mxu0 0.0
    %1177 = vmatpush1.msra.mxu0 %v174
    %1178 = vmatprep.subr.mxu0 0.0
    %1179 = vmatpush1.msra.mxu0 %v175
    %1180 = vmatprep.subr.mxu0 0.0
    %1181 = vmatpush1.msra.mxu0 %v176
    %1182 = vmatprep.subr.mxu0 0.0
    %1183 = vmatpush1.msra.mxu0 0.0
    %1184 = vmatprep.subr.mxu0 0.0
    %1185 = vmatpush1.msra.mxu0 0.0
    %1186 = vmatprep.subr.mxu0 0.0
    %1187 = vmatpush1.msra.mxu0 0.0
    %1188 = vmatprep.subr.mxu0 0.0
    %1189 = vmatpush1.msra.mxu0 0.0
    %1190 = vmatprep.subr.mxu0 0.0
    %1191 = vmatpush1.msra.mxu0 0.0
    %1192 = vmatprep.subr.mxu0 0.0
    %1193 = vmatpush1.msra.mxu0 0.0
    %1194 = vmatprep.subr.mxu0 0.0
    %1195 = vmatpush1.msra.mxu0 0.0
    %1196 = vmatprep.subr.mxu0 0.0
    %1197 = vmatpush1.msra.mxu0 0.0
    %1198 = vmatprep.subr.mxu0 0.0
    %1199 = vmatpush1.msra.mxu0 0.0
    %1200 = vmatprep.subr.mxu0 0.0
    %1201 = vmatpush1.msra.mxu0 0.0
    %1202 = vmatprep.subr.mxu0 0.0
    %1203 = vmatpush1.msra.mxu0 0.0
    %1204 = vmatprep.subr.mxu0 0.0
    %1205 = vmatpush1.msra.mxu0 0.0
    %1206 = vmatprep.subr.mxu0 0.0
    %1207 = vmatpush1.msra.mxu0 0.0
    %1208 = vmatprep.subr.mxu0 0.0
    %1209 = vmatpush1.msra.mxu0 0.0
    %1210 = vmatprep.subr.mxu0 0.0
    %1211 = vmatpush1.msra.mxu0 0.0
    %1212 = vmatprep.subr.mxu0 0.0
    %1213 = vmatpush1.msra.mxu0 0.0
    %1214 = vmatprep.subr.mxu0 0.0
    %1215 = vmatpush1.msra.mxu0 0.0
    %1216 = vmatprep.subr.mxu0 0.0
    %1217 = vmatpush1.msra.mxu0 0.0
    %1218 = vmatprep.subr.mxu0 0.0
    %1219 = vmatpush1.msra.mxu0 0.0
    %1220 = vmatprep.subr.mxu0 0.0
    %1221 = vmatpush1.msra.mxu0 0.0
    %1222 = vmatprep.subr.mxu0 0.0
    %1223 = vmatpush1.msra.mxu0 0.0
    %1224 = vmatprep.subr.mxu0 0.0
    %1225 = vmatpush1.msra.mxu0 0.0
    %1226 = vmatprep.subr.mxu0 0.0
    %1227 = vmatpush1.msra.mxu0 0.0
    %1228 = vmatprep.subr.mxu0 0.0
    %1229 = vmatpush1.msra.mxu0 0.0
    %1230 = vmatprep.subr.mxu0 0.0
    %1231 = vmatpush1.msra.mxu0 0.0
    %1232 = vmatprep.subr.mxu0 0.0
    %1233 = vmatpush1.msra.mxu0 0.0
    %1234 = vmatprep.subr.mxu0 0.0
    %1235 = vmatpush1.msra.mxu0 0.0
    %1236 = vmatprep.subr.mxu0 0.0
    %1237 = vmatpush1.msra.mxu0 0.0
    %1238 = vmatprep.mubr.f32.mxu0 0.0
    %1239 = vmatmul.mubr.f32.gmra.mrb[0].mxu0 %v1172
    %v1240 = vpop.f32.mrb[0].mxu0
    %v1241 = vadd.f32 %v192, %v1240
    %v1242 = vpop.f32.mrb[0].mxu0
    %1243 = vdwg.mxu0
    %v1244 = vadd.f32 %v170, %v1241
    %v1245 = vxor.u32 %v1244, 2147483648
    %v1246 = vmul.f32 %v1245, 1.442695
    %v1247 = vpow.pop %v1246
    %v1248 = vadd.f32 %v1247, 1.0
    %v1249 = vrcp.pop %v1248
    %v1250 = vmul.f32 1.0, %v1249
    %1252 = vrot.lane.b32.xlu0 %v1241, 96
    %v1253 = vpop.permute.xlu0 %1252
    %v1255 = vmul.f32 %v1250, %v1253
    %1257 = vrot.lane.b32.xlu0 %v1255, 32
    %v1258 = vpop.permute.xlu0 %1257
    %v1260 = vadd.f32 %v170, %v1258
    %v1261 = vtanh.pop %v1260
    %v1262 = vsub.f32 1.0, %v1250
    %1264 = vrot.lane.b32.xlu0 %v1261, 112
    %v1265 = vpop.permute.xlu0 %1264
    %v1267 = vmul.f32 %v1262, %v1265
    %v1268 = vmul.f32 %v1250, %v1136
    %v1269 = vadd.f32 %v1267, %v1268
    %v1270 = vsel %vm325, %v1269, 0.0
    %v1271 = vadd.f32 %v135, %v1241
    %v1272 = vxor.u32 %v1271, 2147483648
    %v1273 = vmul.f32 %v1272, 1.442695
    %v1274 = vpow.pop %v1273
    %v1275 = vadd.f32 %v1274, 1.0
    %v1276 = vrcp.pop %v1275
    %v1277 = vmul.f32 1.0, %v1276
    %v1278 = vmul.f32 %v1277, %v1253
    %1280 = vrot.lane.b32.xlu0 %v1278, 32
    %v1281 = vpop.permute.xlu0 %1280
    %v1283 = vadd.f32 %v135, %v1281
    %v1284 = vtanh.pop %v1283
    %v1285 = vsub.f32 1.0, %v1277
    %1287 = vrot.lane.b32.xlu0 %v1284, 112
    %v1288 = vpop.permute.xlu0 %1287
    %v1290 = vmul.f32 %v1285, %v1288
    %v1291 = vmul.f32 %v1277, %v1160
    %v1292 = vadd.f32 %v1290, %v1291
    %v1293 = vsel %vm297, %v1292, 0.0
    %1295 = vrot.lane.b32.xlu0 %v1293, 80
    %v1296 = vpop.permute.xlu0 %1295
    %v1298 = vsel %vm335, %v329, %v1296
    %1300 = vrot.lane.b32.xlu0 %v442, 112
    %v1301 = vpop.permute.xlu0 %1300
    %1304 = vrot.lane.b32.xlu0 %v1161, 80
    %v1305 = vpop.permute.xlu0 %1304
    %v1307 = vsel %vm335, %v1301, %v1305
    %1309 = vrot.lane.b32.xlu0 %v586, 112
    %v1310 = vpop.permute.xlu0 %1309
    %1313 = vrot.lane.b32.xlu0 %v1027, 80
    %v1314 = vpop.permute.xlu0 %1313
    %v1316 = vsel %vm335, %v1310, %v1314
    %1318 = vrot.lane.b32.xlu0 %v730, 112
    %v1319 = vpop.permute.xlu0 %1318
    %1322 = vrot.lane.b32.xlu0 %v893, 80
    %v1323 = vpop.permute.xlu0 %1322
    %v1325 = vsel %vm335, %v1319, %v1323
    %1327 = vrot.lane.b32.xlu0 %v869, 112
    %v1328 = vpop.permute.xlu0 %1327
    %1331 = vrot.lane.b32.xlu0 %v759, 80
    %v1332 = vpop.permute.xlu0 %1331
    %v1334 = vsel %vm335, %v1328, %v1332
    %1336 = vrot.lane.b32.xlu0 %v1003, 112
    %v1337 = vpop.permute.xlu0 %1336
    %1340 = vrot.lane.b32.xlu0 %v615, 80
    %v1341 = vpop.permute.xlu0 %1340
    %v1343 = vsel %vm335, %v1337, %v1341
    %1345 = vrot.lane.b32.xlu0 %v1137, 112
    %v1346 = vpop.permute.xlu0 %1345
    %1349 = vrot.lane.b32.xlu0 %v471, 80
    %v1350 = vpop.permute.xlu0 %1349
    %v1352 = vsel %vm335, %v1346, %v1350
    %1354 = vrot.lane.b32.xlu0 %v1270, 112
    %v1355 = vpop.permute.xlu0 %1354
    %v1357 = vsel %vm335, %v1355, %v333
    %v1359 = vrot.slane %v1307, 7
    %v1362 = vrot.slane %v1316, 6
    %v1365 = vrot.slane %v1325, 5
    %v1368 = vrot.slane %v1334, 4
    %v1371 = vrot.slane %v1343, 3
    %v1374 = vrot.slane %v1352, 2
    %v1377 = vrot.slane %v1357, 1
    %v1380 = vrot.slane %v1298, 1
    %v1382 = vrot.slane %v1316, 7
    %v1384 = vrot.slane %v1325, 6
    %v1386 = vrot.slane %v1334, 5
    %v1388 = vrot.slane %v1343, 4
    %v1390 = vrot.slane %v1352, 3
    %v1392 = vrot.slane %v1357, 2
    %vm1394 = vcmask 1040384
    %v1395 = vsel %vm1394, %v1298, %v1359
    %vm1396 = vcmask 1041408
    %v1397 = vsel %vm1396, %v1395, %v1362
    %vm1398 = vcmask 1042432
    %v1399 = vsel %vm1398, %v1397, %v1365
    %vm1400 = vcmask 1043456
    %v1401 = vsel %vm1400, %v1399, %v1368
    %vm1402 = vcmask 1044480
    %v1403 = vsel %vm1402, %v1401, %v1371
    %vm1404 = vcmask 1045504
    %v1405 = vsel %vm1404, %v1403, %v1374
    %vm1406 = vcmask 1046528
    %v1407 = vsel %vm1406, %v1405, %v1377
    %v1408 = vsel %vm1394, %v1380, %v1307
    %v1409 = vsel %vm1396, %v1408, %v1382
    %v1410 = vsel %vm1398, %v1409, %v1384
    %v1411 = vsel %vm1400, %v1410, %v1386
    %v1412 = vsel %vm1402, %v1411, %v1388
    %v1413 = vsel %vm1404, %v1412, %v1390
    %v1414 = vsel %vm1406, %v1413, %v1392
    %v1415 = vrot.slane %v1298, 2
    %v1417 = vrot.slane %v1307, 1
    %v1419 = vrot.slane %v1325, 7
    %v1421 = vrot.slane %v1334, 6
    %v1423 = vrot.slane %v1343, 5
    %v1425 = vrot.slane %v1352, 4
    %v1427 = vrot.slane %v1357, 3
    %v1429 = vrot.slane %v1298, 3
    %v1431 = vrot.slane %v1307, 2
    %v1433 = vrot.slane %v1316, 1
    %v1435 = vrot.slane %v1334, 7
    %v1437 = vrot.slane %v1343, 6
    %v1439 = vrot.slane %v1352, 5
    %v1441 = vrot.slane %v1357, 4
    %v1443 = vsel %vm1394, %v1415, %v1417
    %v1444 = vsel %vm1396, %v1443, %v1316
    %v1445 = vsel %vm1398, %v1444, %v1419
    %v1446 = vsel %vm1400, %v1445, %v1421
    %v1447 = vsel %vm1402, %v1446, %v1423
    %v1448 = vsel %vm1404, %v1447, %v1425
    %v1449 = vsel %vm1406, %v1448, %v1427
    %v1450 = vsel %vm1394, %v1429, %v1431
    %v1451 = vsel %vm1396, %v1450, %v1433
    %v1452 = vsel %vm1398, %v1451, %v1325
    %v1453 = vsel %vm1400, %v1452, %v1435
    %v1454 = vsel %vm1402, %v1453, %v1437
    %v1455 = vsel %vm1404, %v1454, %v1439
    %v1456 = vsel %vm1406, %v1455, %v1441
    %v1458 = vsel %vm43, %v1407, 0
    %v1461 = vsel %vm43, %v1414, 0
    %v1464 = vsel %vm43, %v1449, 0
    %v1467 = vsel %vm43, %v1456, 0
    %1469 = vmatprep.subr.mxu0 0.0
    %1470 = vmatpush1.xpose.msra.mxu0 %v1464
    %1471 = vmatprep.subr.mxu0 0.0
    %1472 = vmatpush1.xpose.msra.mxu0 %v1467
    %1473 = vmatprep.subr.mxu0 0.0
    %1474 = vmatpush1.xpose.msra.mxu0 0.0
    %1475 = vmatprep.subr.mxu0 0.0
    %1476 = vmatpush1.xpose.msra.mxu0 0.0
    %1477 = vmatprep.subr.mxu0 0.0
    %1478 = vmatpush1.xpose.msra.mxu0 0.0
    %1479 = vmatprep.subr.mxu0 0.0
    %1480 = vmatpush1.xpose.msra.mxu0 0.0
    %1481 = vmatprep.subr.mxu0 0.0
    %1482 = vmatpush1.xpose.msra.mxu0 0.0
    %1483 = vmatprep.subr.mxu0 0.0
    %1484 = vmatpush1.xpose.msra.mxu0 0.0
    %1485 = vmatprep.subr.mxu0 0.0
    %1486 = vmatpush1.xpose.msra.mxu0 0.0
    %1487 = vmatprep.subr.mxu0 0.0
    %1488 = vmatpush1.xpose.msra.mxu0 0.0
    %1489 = vmatprep.subr.mxu0 0.0
    %1490 = vmatpush1.xpose.msra.mxu0 0.0
    %1491 = vmatprep.subr.mxu0 0.0
    %1492 = vmatpush1.xpose.msra.mxu0 0.0
    %1493 = vmatprep.subr.mxu0 0.0
    %1494 = vmatpush1.xpose.msra.mxu0 0.0
    %1495 = vmatprep.subr.mxu0 0.0
    %1496 = vmatpush1.xpose.msra.mxu0 0.0
    %1497 = vmatprep.subr.mxu0 0.0
    %1498 = vmatpush1.xpose.msra.mxu0 0.0
    %1499 = vmatprep.subr.mxu0 0.0
    %1500 = vmatpush1.xpose.msra.mxu0 0.0
    %1501 = vmatprep.subr.mxu0 0.0
    %1502 = vmatpush1.xpose.msra.mxu0 0.0
    %1503 = vmatprep.subr.mxu0 0.0
    %1504 = vmatpush1.xpose.msra.mxu0 0.0
    %1505 = vmatprep.subr.mxu0 0.0
    %1506 = vmatpush1.xpose.msra.mxu0 0.0
    %1507 = vmatprep.subr.mxu0 0.0
    %1508 = vmatpush1.xpose.msra.mxu0 0.0
    %1509 = vmatprep.subr.mxu0 0.0
    %1510 = vmatpush1.xpose.msra.mxu0 0.0
    %1511 = vmatprep.subr.mxu0 0.0
    %1512 = vmatpush1.xpose.msra.mxu0 0.0
    %1513 = vmatprep.subr.mxu0 0.0
    %1514 = vmatpush1.xpose.msra.mxu0 0.0
    %1515 = vmatprep.subr.mxu0 0.0
    %1516 = vmatpush1.xpose.msra.mxu0 0.0
    %1517 = vmatprep.subr.mxu0 0.0
    %1518 = vmatpush1.xpose.msra.mxu0 0.0
    %1519 = vmatprep.subr.mxu0 0.0
    %1520 = vmatpush1.xpose.msra.mxu0 0.0
    %1521 = vmatprep.subr.mxu0 0.0
    %1522 = vmatpush1.xpose.msra.mxu0 0.0
    %1523 = vmatprep.subr.mxu0 0.0
    %1524 = vmatpush1.xpose.msra.mxu0 0.0
    %1525 = vmatprep.subr.mxu0 0.0
    %1526 = vmatpush1.xpose.msra.mxu0 0.0
    %1527 = vmatprep.subr.mxu0 0.0
    %1528 = vmatpush1.xpose.msra.mxu0 0.0
    %1529 = vmatprep.subr.mxu0 0.0
    %1530 = vmatpush1.xpose.msra.mxu0 0.0
    %1531 = vmatprep.subr.mxu0 0.0
    %1532 = vmatpush1.xpose.msra.mxu0 0.0
    %1533 = vmatprep.mubr.f32.mxu0 0.0
    %1534 = vmatmul.mubr.f32.gmra.mrb[0].mxu0 %v1458
    %v1535 = vpop.f32.mrb[0].mxu0
    %v1536 = vadd.f32 0.0, %v1535
    %v1537 = vpop.f32.mrb[0].mxu0
    %1538 = vmatprep.mubr.f32.mxu0 0.0
    %1539 = vmatmul.mubr.f32.gmra.mrb[0].mxu0 %v1461
    %v1540 = vpop.f32.mrb[0].mxu0
    %v1541 = vadd.f32 0.0, %v1540
    %v1542 = vpop.f32.mrb[0].mxu0
    %1543 = vdwg.mxu0
    %vm1544 = vcmask 64512
    %1545 = vst.msk [vmem:[#allocation2] sm:$0xff] %vm1544, %v1536
    %1547 = vrot.lane.b32.xlu0 %v1541, 120
    %v1548 = vpop.permute.xlu0 %1547
    %s1550 = scalar_lea.vmem [#allocation2], 8
    %1551 = vst.msk [vmem:[%s1550] sm:$0xff] %vm1544, %v1548
    // Predicated region
    $region26: #{tpu_custom_call.1} parent=1 // pred_check
      _
    $region27: #{tpu_custom_call.1} parent=1 // pred_check_branch
      %1553 = sbr.rel (0) target = $region29
    $region28: #{tpu_custom_call.1} parent=1 // pred_region
      %s1555 = ssub.s32 256, 256
      %1556 = vsyncadd [#allocation3], %s1555
      %s1557 = sshll.u32 [#allocation2], 4
      %s1558 = int_to_ptr.vmem [resolvable:$true] %s1557
      %1563 = dma.vmem_to_hbm [thread:$0]  %s1558, 256, %s6, [#allocation3], 128, 128, 8
    $region29: #{tpu_custom_call.1} parent=1 // pred_fallthru
      _
    // Predicated region
    $region30: #{tpu_custom_call.1} parent=1 // pred_check
      _
    $region31: #{tpu_custom_call.1} parent=1 // pred_check_branch
      %1565 = sbr.rel (0) target = $region33
    $region32: #{tpu_custom_call.1} parent=1 // pred_region
      %1566 = dma.done [#allocation3], 256
    $region33: #{tpu_custom_call.1} parent=1 // pred_fallthru
      _
    %1567 = vsyncpa [#allocation3], 1

</llo_original>
